<compile_context>
chip_gen: v7x
topology: tpu7x:2x2x1
jax: 0.10.0
libtpu: 0.0.40
codegen_flags: <defaults>
</compile_context>

<pallas_src>
import math
import numpy as np
import jax
import jax.numpy as jnp
from jax import lax
from jax.experimental import pallas as pl
from jax.experimental.pallas import tpu as pltpu

D_MODEL = 32
NHEAD = 4
HEAD_DIM = D_MODEL // NHEAD
LN_EPS = 1e-5


def _self_attn_kernel(x_ref, pos_ref, w_ref, vec_ref, out_ref):
    # x_ref / pos_ref / out_ref: (L, N, E)  -- whole batch in one grid step
    # w_ref:   (E, 4E) = [Wq^T * scale | Wk^T | Wv^T | Wo^T]
    # vec_ref: (8, E)  = [bq*scale, bk, bv, bo, gamma, beta, 0, 0]
    L, N, E = x_ref.shape
    H, hd = NHEAD, E // NHEAD

    w = w_ref[...]
    wqk = w[:, : 2 * E]              # fused Q|K projection weights (E, 2E)
    wv = w[:, 2 * E: 3 * E]
    wo = w[:, 3 * E:]

    vecs = vec_ref[...]
    bq, bk, bv, bo = vecs[0:1], vecs[1:2], vecs[2:3], vecs[3:4]
    gamma, beta = vecs[4:5], vecs[5:6]

    for b in range(N):               # static unroll over the (small) batch
        x = x_ref[:, b, :].astype(jnp.float32)                # (L, E)
        qk_in = x + pos_ref[:, b, :].astype(jnp.float32)

        # fused Q/K projection: one (L, E) x (E, 2E) matmul, then split
        qk = jnp.dot(qk_in, wqk, preferred_element_type=jnp.float32)   # (L, 2E)
        q = qk[:, :E] + bq           # 1/sqrt(hd) already folded into wq/bq
        k = qk[:, E:] + bk
        v = jnp.dot(x, wv, preferred_element_type=jnp.float32) + bv

        # per-head scaled-dot-product attention, all in registers
        heads = []
        for h in range(H):
            lo = h * hd
            qh = q[:, lo:lo + hd]    # (L, hd)
            kh = k[:, lo:lo + hd]
            vh = v[:, lo:lo + hd]
            # q @ k^T without materializing the transpose
            s = lax.dot_general(qh, kh, (((1,), (1,)), ((), ())),
                                preferred_element_type=jnp.float32)     # (L, L)
            s = s - jnp.max(s, axis=-1, keepdims=True)
            p = jnp.exp(s)
            # exact normalization (approximate reciprocal was not accurate enough)
            p = p / jnp.sum(p, axis=-1, keepdims=True)
            heads.append(jnp.dot(p, vh, preferred_element_type=jnp.float32))
        attn = jnp.concatenate(heads, axis=-1)                          # (L, E)

        # output projection + residual + LayerNorm
        proj = jnp.dot(attn, wo, preferred_element_type=jnp.float32) + bo
        y = x + proj
        mean = jnp.mean(y, axis=-1, keepdims=True)
        var = jnp.mean((y - mean) ** 2, axis=-1, keepdims=True)
        normed = (y - mean) * lax.rsqrt(var + LN_EPS)
        out_ref[:, b, :] = (normed * gamma + beta).astype(out_ref.dtype)


def _pack_params(params):
    """Pack the 10 small parameter tensors into 2 slabs; fold the softmax scale."""
    E = D_MODEL
    scale = 1.0 / math.sqrt(HEAD_DIM)
    w_slab = jnp.concatenate(
        [params["wq"].T * scale, params["wk"].T, params["wv"].T, params["wo"].T],
        axis=1).astype(jnp.float32)                                     # (E, 4E)
    zeros = jnp.zeros((E,), jnp.float32)
    vec_slab = jnp.stack(
        [params["bq"] * scale, params["bk"], params["bv"], params["bo"],
         params["gamma"], params["beta"], zeros, zeros], axis=0).astype(jnp.float32)  # (8, E)
    return w_slab, vec_slab


@jax.jit
def self_attention_layer(tgt, query_pos, params):
    """tgt, query_pos: (L, N, E) float32 -> (L, N, E) float32 (PyTorch MHA layout)."""
    L, N, E = tgt.shape
    assert E == D_MODEL
    w_slab, vec_slab = _pack_params(params)

    full3 = pl.BlockSpec((L, N, E), lambda i: (0, 0, 0))
    return pl.pallas_call(
        _self_attn_kernel,
        out_shape=jax.ShapeDtypeStruct((L, N, E), jnp.float32),
        grid=(1,),
        in_specs=[
            full3,                                          # tgt
            full3,                                          # query_pos
            pl.BlockSpec((E, 4 * E), lambda i: (0, 0)),     # packed weights
            pl.BlockSpec((8, E), lambda i: (0, 0)),         # packed bias/LN vectors
        ],
        out_specs=full3,
        compiler_params=pltpu.CompilerParams(dimension_semantics=("arbitrary",)),
    )(tgt, query_pos, w_slab, vec_slab)


def reference(tgt, pos, p):
    """Pure-JAX reference mirroring nn.MultiheadAttention + residual + LayerNorm."""
    L, N, E = tgt.shape
    H, hd = NHEAD, HEAD_DIM
    qk_in = tgt + pos
    q = qk_in @ p["wq"].T + p["bq"]
    k = qk_in @ p["wk"].T + p["bk"]
    v = tgt @ p["wv"].T + p["bv"]

    def split(a):
        return a.reshape(L, N, H, hd).transpose(1, 2, 0, 3)   # (N, H, L, hd)

    qh, kh, vh = split(q), split(k), split(v)
    s = jnp.einsum("nhqd,nhkd->nhqk", qh, kh) / jnp.sqrt(float(hd))
    pmat = jax.nn.softmax(s, axis=-1)
    o = jnp.einsum("nhqk,nhkd->nhqd", pmat, vh)
    o = o.transpose(2, 0, 1, 3).reshape(L, N, E)
    o = o @ p["wo"].T + p["bo"]
    y = tgt + o
    mean = y.mean(-1, keepdims=True)
    var = ((y - mean) ** 2).mean(-1, keepdims=True)
    return (y - mean) / jnp.sqrt(var + LN_EPS) * p["gamma"] + p["beta"]


def _xavier_uniform(key, shape):
    fan_in, fan_out = shape[1], shape[0]
    bound = float(np.sqrt(6.0 / (fan_in + fan_out)))
    return jax.random.uniform(key, shape, jnp.float32, -bound, bound)


if __name__ == "__main__":
    L, N, E = 8, 2, D_MODEL   # seq=8, batch=2, d_model=32, nhead=4

    key = jax.random.PRNGKey(0)
    keys = jax.random.split(key, 12)

    # Deterministic synthetic parameters (nn.MultiheadAttention / LayerNorm shapes).
    # Non-zero biases / affine params so bias & scale-folding paths are exercised.
    params = {
        "wq": _xavier_uniform(keys[0], (E, E)),
        "wk": _xavier_uniform(keys[1], (E, E)),
        "wv": _xavier_uniform(keys[2], (E, E)),
        "wo": _xavier_uniform(keys[3], (E, E)),
        "bq": 0.1 * jax.random.normal(keys[4], (E,), jnp.float32),
        "bk": 0.1 * jax.random.normal(keys[5], (E,), jnp.float32),
        "bv": 0.1 * jax.random.normal(keys[6], (E,), jnp.float32),
        "bo": 0.1 * jax.random.normal(keys[7], (E,), jnp.float32),
        "gamma": 1.0 + 0.1 * jax.random.normal(keys[8], (E,), jnp.float32),
        "beta": 0.1 * jax.random.normal(keys[9], (E,), jnp.float32),
    }

    tgt = jax.random.normal(keys[10], (L, N, E), jnp.float32)
    query_pos = jax.random.normal(keys[11], (L, N, E), jnp.float32)

    out = jax.block_until_ready(self_attention_layer(tgt, query_pos, params))

    ref = reference(tgt, query_pos, params)
    # exact softmax normalization in-kernel: differences are only fp32
    # accumulation-order / MXU rounding noise, far below this tolerance
    np.testing.assert_allclose(np.asarray(out), np.asarray(ref), rtol=2e-3, atol=2e-3)

    print("KERNEL_OK")
</pallas_src>

<mosaic_0001>
module attributes {stable_mosaic.version = 11 : i64} {
  func.func @_self_attn_kernel(%arg0: i32, %arg1: memref<8x2x32xf32, #tpu.memory_space<vmem>>, %arg2: memref<8x2x32xf32, #tpu.memory_space<vmem>>, %arg3: memref<32x128xf32, #tpu.memory_space<vmem>>, %arg4: memref<8x32xf32, #tpu.memory_space<vmem>>, %arg5: memref<8x2x32xf32, #tpu.memory_space<vmem>>) attributes {dimension_semantics = [#tpu.dimension_semantics<arbitrary>], iteration_bounds = array<i64: 1>, scalar_prefetch = 0 : i64, scratch_operands = 0 : i64, tpu.core_type = #tpu.core_type<tc>, window_params = [{pipeline_mode = #tpu.pipeline_mode<synchronous>, transform_indices = @transform_0, window_bounds = array<i64: 8, 2, 32>}, {pipeline_mode = #tpu.pipeline_mode<synchronous>, transform_indices = @transform_1, window_bounds = array<i64: 8, 2, 32>}, {pipeline_mode = #tpu.pipeline_mode<synchronous>, transform_indices = @transform_2, window_bounds = array<i64: 32, 128>}, {pipeline_mode = #tpu.pipeline_mode<synchronous>, transform_indices = @transform_3, window_bounds = array<i64: 8, 32>}, {pipeline_mode = #tpu.pipeline_mode<synchronous>, transform_indices = @transform_4, window_bounds = array<i64: 8, 2, 32>}]} {
    %c0 = arith.constant 0 : index
    %c0_0 = arith.constant 0 : index
    %0 = vector.load %arg3[%c0, %c0_0] : memref<32x128xf32, #tpu.memory_space<vmem>>, vector<32x128xf32>
    %1 = vector.extract_strided_slice %0 {offsets = [0, 0], sizes = [32, 64], strides = [1, 1]} : vector<32x128xf32> to vector<32x64xf32>
    %2 = vector.extract_strided_slice %0 {offsets = [0, 64], sizes = [32, 32], strides = [1, 1]} : vector<32x128xf32> to vector<32x32xf32>
    %3 = vector.extract_strided_slice %0 {offsets = [0, 96], sizes = [32, 32], strides = [1, 1]} : vector<32x128xf32> to vector<32x32xf32>
    %c0_1 = arith.constant 0 : index
    %c0_2 = arith.constant 0 : index
    %4 = vector.load %arg4[%c0_1, %c0_2] : memref<8x32xf32, #tpu.memory_space<vmem>>, vector<8x32xf32>
    %5 = vector.extract_strided_slice %4 {offsets = [0, 0], sizes = [1, 32], strides = [1, 1]} : vector<8x32xf32> to vector<1x32xf32>
    %6 = vector.extract_strided_slice %4 {offsets = [1, 0], sizes = [1, 32], strides = [1, 1]} : vector<8x32xf32> to vector<1x32xf32>
    %7 = vector.extract_strided_slice %4 {offsets = [2, 0], sizes = [1, 32], strides = [1, 1]} : vector<8x32xf32> to vector<1x32xf32>
    %8 = vector.extract_strided_slice %4 {offsets = [3, 0], sizes = [1, 32], strides = [1, 1]} : vector<8x32xf32> to vector<1x32xf32>
    %9 = vector.extract_strided_slice %4 {offsets = [4, 0], sizes = [1, 32], strides = [1, 1]} : vector<8x32xf32> to vector<1x32xf32>
    %10 = vector.extract_strided_slice %4 {offsets = [5, 0], sizes = [1, 32], strides = [1, 1]} : vector<8x32xf32> to vector<1x32xf32>
    %c0_3 = arith.constant 0 : index
    %c0_4 = arith.constant 0 : index
    %c0_5 = arith.constant 0 : index
    %11 = vector.load %arg1[%c0_3, %c0_4, %c0_5] : memref<8x2x32xf32, #tpu.memory_space<vmem>>, vector<8x1x32xf32>
    %12 = vector.shape_cast %11 : vector<8x1x32xf32> to vector<8x32xf32>
    %c0_6 = arith.constant 0 : index
    %c0_7 = arith.constant 0 : index
    %c0_8 = arith.constant 0 : index
    %13 = vector.load %arg2[%c0_6, %c0_7, %c0_8] : memref<8x2x32xf32, #tpu.memory_space<vmem>>, vector<8x1x32xf32>
    %14 = vector.shape_cast %13 : vector<8x1x32xf32> to vector<8x32xf32>
    %15 = arith.addf %12, %14 : vector<8x32xf32>
    %cst = arith.constant dense<0.000000e+00> : vector<8x64xf32>
    %16 = tpu.matmul %15, %1, %cst {dimension_numbers = #tpu.dot_dimension_numbers<[1], [0], [0], [1], [0, 0, 1, 1], [], []>} : vector<8x32xf32>, vector<32x64xf32>, vector<8x64xf32> -> vector<8x64xf32>
    %17 = vector.extract_strided_slice %16 {offsets = [0, 0], sizes = [8, 32], strides = [1, 1]} : vector<8x64xf32> to vector<8x32xf32>
    %18 = vector.broadcast %5 : vector<1x32xf32> to vector<8x32xf32>
    %19 = arith.addf %17, %18 : vector<8x32xf32>
    %20 = vector.extract_strided_slice %16 {offsets = [0, 32], sizes = [8, 32], strides = [1, 1]} : vector<8x64xf32> to vector<8x32xf32>
    %21 = vector.broadcast %6 : vector<1x32xf32> to vector<8x32xf32>
    %22 = arith.addf %20, %21 : vector<8x32xf32>
    %cst_9 = arith.constant dense<0.000000e+00> : vector<8x32xf32>
    %23 = tpu.matmul %12, %2, %cst_9 {dimension_numbers = #tpu.dot_dimension_numbers<[1], [0], [0], [1], [0, 0, 1, 1], [], []>} : vector<8x32xf32>, vector<32x32xf32>, vector<8x32xf32> -> vector<8x32xf32>
    %24 = vector.broadcast %7 : vector<1x32xf32> to vector<8x32xf32>
    %25 = arith.addf %23, %24 : vector<8x32xf32>
    %26 = vector.extract_strided_slice %19 {offsets = [0, 0], sizes = [8, 8], strides = [1, 1]} : vector<8x32xf32> to vector<8x8xf32>
    %27 = vector.extract_strided_slice %22 {offsets = [0, 0], sizes = [8, 8], strides = [1, 1]} : vector<8x32xf32> to vector<8x8xf32>
    %28 = vector.extract_strided_slice %25 {offsets = [0, 0], sizes = [8, 8], strides = [1, 1]} : vector<8x32xf32> to vector<8x8xf32>
    %cst_10 = arith.constant dense<0.000000e+00> : vector<8x8xf32>
    %29 = tpu.matmul %26, %27, %cst_10 {dimension_numbers = #tpu.dot_dimension_numbers<[1], [1], [0], [0], [0, 0, 1, 0], [], []>} : vector<8x8xf32>, vector<8x8xf32>, vector<8x8xf32> -> vector<8x8xf32>
    %cst_11 = arith.constant dense<0xFF800000> : vector<8xf32>
    %30 = vector.multi_reduction <maximumf>, %29, %cst_11 [1] : vector<8x8xf32> to vector<8xf32>
    %31 = vector.shape_cast %30 : vector<8xf32> to vector<8x1xf32>
    %32 = vector.broadcast %31 : vector<8x1xf32> to vector<8x8xf32>
    %33 = arith.subf %29, %32 : vector<8x8xf32>
    %34 = math.exp %33 : vector<8x8xf32>
    %cst_12 = arith.constant dense<0.000000e+00> : vector<8xf32>
    %35 = vector.multi_reduction <add>, %34, %cst_12 [1] : vector<8x8xf32> to vector<8xf32>
    %36 = vector.shape_cast %35 : vector<8xf32> to vector<8x1xf32>
    %37 = vector.broadcast %36 : vector<8x1xf32> to vector<8x8xf32>
    %38 = arith.divf %34, %37 : vector<8x8xf32>
    %cst_13 = arith.constant dense<0.000000e+00> : vector<8x8xf32>
    %39 = tpu.matmul %38, %28, %cst_13 {dimension_numbers = #tpu.dot_dimension_numbers<[1], [0], [0], [1], [0, 0, 1, 1], [], []>} : vector<8x8xf32>, vector<8x8xf32>, vector<8x8xf32> -> vector<8x8xf32>
    %40 = vector.extract_strided_slice %19 {offsets = [0, 8], sizes = [8, 8], strides = [1, 1]} : vector<8x32xf32> to vector<8x8xf32>
    %41 = vector.extract_strided_slice %22 {offsets = [0, 8], sizes = [8, 8], strides = [1, 1]} : vector<8x32xf32> to vector<8x8xf32>
    %42 = vector.extract_strided_slice %25 {offsets = [0, 8], sizes = [8, 8], strides = [1, 1]} : vector<8x32xf32> to vector<8x8xf32>
    %cst_14 = arith.constant dense<0.000000e+00> : vector<8x8xf32>
    %43 = tpu.matmul %40, %41, %cst_14 {dimension_numbers = #tpu.dot_dimension_numbers<[1], [1], [0], [0], [0, 0, 1, 0], [], []>} : vector<8x8xf32>, vector<8x8xf32>, vector<8x8xf32> -> vector<8x8xf32>
    %cst_15 = arith.constant dense<0xFF800000> : vector<8xf32>
    %44 = vector.multi_reduction <maximumf>, %43, %cst_15 [1] : vector<8x8xf32> to vector<8xf32>
    %45 = vector.shape_cast %44 : vector<8xf32> to vector<8x1xf32>
    %46 = vector.broadcast %45 : vector<8x1xf32> to vector<8x8xf32>
    %47 = arith.subf %43, %46 : vector<8x8xf32>
    %48 = math.exp %47 : vector<8x8xf32>
    %cst_16 = arith.constant dense<0.000000e+00> : vector<8xf32>
    %49 = vector.multi_reduction <add>, %48, %cst_16 [1] : vector<8x8xf32> to vector<8xf32>
    %50 = vector.shape_cast %49 : vector<8xf32> to vector<8x1xf32>
    %51 = vector.broadcast %50 : vector<8x1xf32> to vector<8x8xf32>
    %52 = arith.divf %48, %51 : vector<8x8xf32>
    %cst_17 = arith.constant dense<0.000000e+00> : vector<8x8xf32>
    %53 = tpu.matmul %52, %42, %cst_17 {dimension_numbers = #tpu.dot_dimension_numbers<[1], [0], [0], [1], [0, 0, 1, 1], [], []>} : vector<8x8xf32>, vector<8x8xf32>, vector<8x8xf32> -> vector<8x8xf32>
    %54 = vector.extract_strided_slice %19 {offsets = [0, 16], sizes = [8, 8], strides = [1, 1]} : vector<8x32xf32> to vector<8x8xf32>
    %55 = vector.extract_strided_slice %22 {offsets = [0, 16], sizes = [8, 8], strides = [1, 1]} : vector<8x32xf32> to vector<8x8xf32>
    %56 = vector.extract_strided_slice %25 {offsets = [0, 16], sizes = [8, 8], strides = [1, 1]} : vector<8x32xf32> to vector<8x8xf32>
    %cst_18 = arith.constant dense<0.000000e+00> : vector<8x8xf32>
    %57 = tpu.matmul %54, %55, %cst_18 {dimension_numbers = #tpu.dot_dimension_numbers<[1], [1], [0], [0], [0, 0, 1, 0], [], []>} : vector<8x8xf32>, vector<8x8xf32>, vector<8x8xf32> -> vector<8x8xf32>
    %cst_19 = arith.constant dense<0xFF800000> : vector<8xf32>
    %58 = vector.multi_reduction <maximumf>, %57, %cst_19 [1] : vector<8x8xf32> to vector<8xf32>
    %59 = vector.shape_cast %58 : vector<8xf32> to vector<8x1xf32>
    %60 = vector.broadcast %59 : vector<8x1xf32> to vector<8x8xf32>
    %61 = arith.subf %57, %60 : vector<8x8xf32>
    %62 = math.exp %61 : vector<8x8xf32>
    %cst_20 = arith.constant dense<0.000000e+00> : vector<8xf32>
    %63 = vector.multi_reduction <add>, %62, %cst_20 [1] : vector<8x8xf32> to vector<8xf32>
    %64 = vector.shape_cast %63 : vector<8xf32> to vector<8x1xf32>
    %65 = vector.broadcast %64 : vector<8x1xf32> to vector<8x8xf32>
    %66 = arith.divf %62, %65 : vector<8x8xf32>
    %cst_21 = arith.constant dense<0.000000e+00> : vector<8x8xf32>
    %67 = tpu.matmul %66, %56, %cst_21 {dimension_numbers = #tpu.dot_dimension_numbers<[1], [0], [0], [1], [0, 0, 1, 1], [], []>} : vector<8x8xf32>, vector<8x8xf32>, vector<8x8xf32> -> vector<8x8xf32>
    %68 = vector.extract_strided_slice %19 {offsets = [0, 24], sizes = [8, 8], strides = [1, 1]} : vector<8x32xf32> to vector<8x8xf32>
    %69 = vector.extract_strided_slice %22 {offsets = [0, 24], sizes = [8, 8], strides = [1, 1]} : vector<8x32xf32> to vector<8x8xf32>
    %70 = vector.extract_strided_slice %25 {offsets = [0, 24], sizes = [8, 8], strides = [1, 1]} : vector<8x32xf32> to vector<8x8xf32>
    %cst_22 = arith.constant dense<0.000000e+00> : vector<8x8xf32>
    %71 = tpu.matmul %68, %69, %cst_22 {dimension_numbers = #tpu.dot_dimension_numbers<[1], [1], [0], [0], [0, 0, 1, 0], [], []>} : vector<8x8xf32>, vector<8x8xf32>, vector<8x8xf32> -> vector<8x8xf32>
    %cst_23 = arith.constant dense<0xFF800000> : vector<8xf32>
    %72 = vector.multi_reduction <maximumf>, %71, %cst_23 [1] : vector<8x8xf32> to vector<8xf32>
    %73 = vector.shape_cast %72 : vector<8xf32> to vector<8x1xf32>
    %74 = vector.broadcast %73 : vector<8x1xf32> to vector<8x8xf32>
    %75 = arith.subf %71, %74 : vector<8x8xf32>
    %76 = math.exp %75 : vector<8x8xf32>
    %cst_24 = arith.constant dense<0.000000e+00> : vector<8xf32>
    %77 = vector.multi_reduction <add>, %76, %cst_24 [1] : vector<8x8xf32> to vector<8xf32>
    %78 = vector.shape_cast %77 : vector<8xf32> to vector<8x1xf32>
    %79 = vector.broadcast %78 : vector<8x1xf32> to vector<8x8xf32>
    %80 = arith.divf %76, %79 : vector<8x8xf32>
    %cst_25 = arith.constant dense<0.000000e+00> : vector<8x8xf32>
    %81 = tpu.matmul %80, %70, %cst_25 {dimension_numbers = #tpu.dot_dimension_numbers<[1], [0], [0], [1], [0, 0, 1, 1], [], []>} : vector<8x8xf32>, vector<8x8xf32>, vector<8x8xf32> -> vector<8x8xf32>
    %82 = tpu.concatenate %39, %53, %67, %81 in 1 : vector<8x8xf32>, vector<8x8xf32>, vector<8x8xf32>, vector<8x8xf32> -> vector<8x32xf32>
    %cst_26 = arith.constant dense<0.000000e+00> : vector<8x32xf32>
    %83 = tpu.matmul %82, %3, %cst_26 {dimension_numbers = #tpu.dot_dimension_numbers<[1], [0], [0], [1], [0, 0, 1, 1], [], []>} : vector<8x32xf32>, vector<32x32xf32>, vector<8x32xf32> -> vector<8x32xf32>
    %84 = vector.broadcast %8 : vector<1x32xf32> to vector<8x32xf32>
    %85 = arith.addf %83, %84 : vector<8x32xf32>
    %86 = arith.addf %12, %85 : vector<8x32xf32>
    %cst_27 = arith.constant dense<0.000000e+00> : vector<8xf32>
    %87 = vector.multi_reduction <add>, %86, %cst_27 [1] : vector<8x32xf32> to vector<8xf32>
    %88 = vector.shape_cast %87 : vector<8xf32> to vector<8x1xf32>
    %cst_28 = arith.constant 3.200000e+01 : f32
    %89 = vector.broadcast %cst_28 : f32 to vector<8x1xf32>
    %90 = arith.divf %88, %89 : vector<8x1xf32>
    %91 = vector.broadcast %90 : vector<8x1xf32> to vector<8x32xf32>
    %92 = arith.subf %86, %91 : vector<8x32xf32>
    %93 = arith.mulf %92, %92 : vector<8x32xf32>
    %cst_29 = arith.constant dense<0.000000e+00> : vector<8xf32>
    %94 = vector.multi_reduction <add>, %93, %cst_29 [1] : vector<8x32xf32> to vector<8xf32>
    %95 = vector.shape_cast %94 : vector<8xf32> to vector<8x1xf32>
    %cst_30 = arith.constant 3.200000e+01 : f32
    %96 = vector.broadcast %cst_30 : f32 to vector<8x1xf32>
    %97 = arith.divf %95, %96 : vector<8x1xf32>
    %98 = vector.broadcast %90 : vector<8x1xf32> to vector<8x32xf32>
    %99 = arith.subf %86, %98 : vector<8x32xf32>
    %cst_31 = arith.constant 9.99999974E-6 : f32
    %100 = vector.broadcast %cst_31 : f32 to vector<8x1xf32>
    %101 = arith.addf %97, %100 : vector<8x1xf32>
    %102 = math.rsqrt %101 : vector<8x1xf32>
    %103 = vector.broadcast %102 : vector<8x1xf32> to vector<8x32xf32>
    %104 = arith.mulf %99, %103 : vector<8x32xf32>
    %105 = vector.broadcast %9 : vector<1x32xf32> to vector<8x32xf32>
    %106 = arith.mulf %104, %105 : vector<8x32xf32>
    %107 = vector.broadcast %10 : vector<1x32xf32> to vector<8x32xf32>
    %108 = arith.addf %106, %107 : vector<8x32xf32>
    %c0_32 = arith.constant 0 : index
    %c0_33 = arith.constant 0 : index
    %c0_34 = arith.constant 0 : index
    %109 = vector.load %arg5[%c0_32, %c0_33, %c0_34] : memref<8x2x32xf32, #tpu.memory_space<vmem>>, vector<8x1x32xf32>
    %110 = vector.shape_cast %109 : vector<8x1x32xf32> to vector<8x32xf32>
    %111 = vector.shape_cast %108 : vector<8x32xf32> to vector<8x1x32xf32>
    tpu.vector_store %arg5[%c0_32, %c0_33, %c0_34], %111 {strides = array<i32>} : memref<8x2x32xf32, #tpu.memory_space<vmem>>, vector<8x1x32xf32>,
    %c0_35 = arith.constant 0 : index
    %c1 = arith.constant 1 : index
    %c0_36 = arith.constant 0 : index
    %112 = vector.load %arg1[%c0_35, %c1, %c0_36] : memref<8x2x32xf32, #tpu.memory_space<vmem>>, vector<8x1x32xf32>
    %113 = vector.shape_cast %112 : vector<8x1x32xf32> to vector<8x32xf32>
    %c0_37 = arith.constant 0 : index
    %c1_38 = arith.constant 1 : index
    %c0_39 = arith.constant 0 : index
    %114 = vector.load %arg2[%c0_37, %c1_38, %c0_39] : memref<8x2x32xf32, #tpu.memory_space<vmem>>, vector<8x1x32xf32>
    %115 = vector.shape_cast %114 : vector<8x1x32xf32> to vector<8x32xf32>
    %116 = arith.addf %113, %115 : vector<8x32xf32>
    %cst_40 = arith.constant dense<0.000000e+00> : vector<8x64xf32>
    %117 = tpu.matmul %116, %1, %cst_40 {dimension_numbers = #tpu.dot_dimension_numbers<[1], [0], [0], [1], [0, 0, 1, 1], [], []>} : vector<8x32xf32>, vector<32x64xf32>, vector<8x64xf32> -> vector<8x64xf32>
    %118 = vector.extract_strided_slice %117 {offsets = [0, 0], sizes = [8, 32], strides = [1, 1]} : vector<8x64xf32> to vector<8x32xf32>
    %119 = vector.broadcast %5 : vector<1x32xf32> to vector<8x32xf32>
    %120 = arith.addf %118, %119 : vector<8x32xf32>
    %121 = vector.extract_strided_slice %117 {offsets = [0, 32], sizes = [8, 32], strides = [1, 1]} : vector<8x64xf32> to vector<8x32xf32>
    %122 = vector.broadcast %6 : vector<1x32xf32> to vector<8x32xf32>
    %123 = arith.addf %121, %122 : vector<8x32xf32>
    %cst_41 = arith.constant dense<0.000000e+00> : vector<8x32xf32>
    %124 = tpu.matmul %113, %2, %cst_41 {dimension_numbers = #tpu.dot_dimension_numbers<[1], [0], [0], [1], [0, 0, 1, 1], [], []>} : vector<8x32xf32>, vector<32x32xf32>, vector<8x32xf32> -> vector<8x32xf32>
    %125 = vector.broadcast %7 : vector<1x32xf32> to vector<8x32xf32>
    %126 = arith.addf %124, %125 : vector<8x32xf32>
    %127 = vector.extract_strided_slice %120 {offsets = [0, 0], sizes = [8, 8], strides = [1, 1]} : vector<8x32xf32> to vector<8x8xf32>
    %128 = vector.extract_strided_slice %123 {offsets = [0, 0], sizes = [8, 8], strides = [1, 1]} : vector<8x32xf32> to vector<8x8xf32>
    %129 = vector.extract_strided_slice %126 {offsets = [0, 0], sizes = [8, 8], strides = [1, 1]} : vector<8x32xf32> to vector<8x8xf32>
    %cst_42 = arith.constant dense<0.000000e+00> : vector<8x8xf32>
    %130 = tpu.matmul %127, %128, %cst_42 {dimension_numbers = #tpu.dot_dimension_numbers<[1], [1], [0], [0], [0, 0, 1, 0], [], []>} : vector<8x8xf32>, vector<8x8xf32>, vector<8x8xf32> -> vector<8x8xf32>
    %cst_43 = arith.constant dense<0xFF800000> : vector<8xf32>
    %131 = vector.multi_reduction <maximumf>, %130, %cst_43 [1] : vector<8x8xf32> to vector<8xf32>
    %132 = vector.shape_cast %131 : vector<8xf32> to vector<8x1xf32>
    %133 = vector.broadcast %132 : vector<8x1xf32> to vector<8x8xf32>
    %134 = arith.subf %130, %133 : vector<8x8xf32>
    %135 = math.exp %134 : vector<8x8xf32>
    %cst_44 = arith.constant dense<0.000000e+00> : vector<8xf32>
    %136 = vector.multi_reduction <add>, %135, %cst_44 [1] : vector<8x8xf32> to vector<8xf32>
    %137 = vector.shape_cast %136 : vector<8xf32> to vector<8x1xf32>
    %138 = vector.broadcast %137 : vector<8x1xf32> to vector<8x8xf32>
    %139 = arith.divf %135, %138 : vector<8x8xf32>
    %cst_45 = arith.constant dense<0.000000e+00> : vector<8x8xf32>
    %140 = tpu.matmul %139, %129, %cst_45 {dimension_numbers = #tpu.dot_dimension_numbers<[1], [0], [0], [1], [0, 0, 1, 1], [], []>} : vector<8x8xf32>, vector<8x8xf32>, vector<8x8xf32> -> vector<8x8xf32>
    %141 = vector.extract_strided_slice %120 {offsets = [0, 8], sizes = [8, 8], strides = [1, 1]} : vector<8x32xf32> to vector<8x8xf32>
    %142 = vector.extract_strided_slice %123 {offsets = [0, 8], sizes = [8, 8], strides = [1, 1]} : vector<8x32xf32> to vector<8x8xf32>
    %143 = vector.extract_strided_slice %126 {offsets = [0, 8], sizes = [8, 8], strides = [1, 1]} : vector<8x32xf32> to vector<8x8xf32>
    %cst_46 = arith.constant dense<0.000000e+00> : vector<8x8xf32>
    %144 = tpu.matmul %141, %142, %cst_46 {dimension_numbers = #tpu.dot_dimension_numbers<[1], [1], [0], [0], [0, 0, 1, 0], [], []>} : vector<8x8xf32>, vector<8x8xf32>, vector<8x8xf32> -> vector<8x8xf32>
    %cst_47 = arith.constant dense<0xFF800000> : vector<8xf32>
    %145 = vector.multi_reduction <maximumf>, %144, %cst_47 [1] : vector<8x8xf32> to vector<8xf32>
    %146 = vector.shape_cast %145 : vector<8xf32> to vector<8x1xf32>
    %147 = vector.broadcast %146 : vector<8x1xf32> to vector<8x8xf32>
    %148 = arith.subf %144, %147 : vector<8x8xf32>
    %149 = math.exp %148 : vector<8x8xf32>
    %cst_48 = arith.constant dense<0.000000e+00> : vector<8xf32>
    %150 = vector.multi_reduction <add>, %149, %cst_48 [1] : vector<8x8xf32> to vector<8xf32>
    %151 = vector.shape_cast %150 : vector<8xf32> to vector<8x1xf32>
    %152 = vector.broadcast %151 : vector<8x1xf32> to vector<8x8xf32>
    %153 = arith.divf %149, %152 : vector<8x8xf32>
    %cst_49 = arith.constant dense<0.000000e+00> : vector<8x8xf32>
    %154 = tpu.matmul %153, %143, %cst_49 {dimension_numbers = #tpu.dot_dimension_numbers<[1], [0], [0], [1], [0, 0, 1, 1], [], []>} : vector<8x8xf32>, vector<8x8xf32>, vector<8x8xf32> -> vector<8x8xf32>
    %155 = vector.extract_strided_slice %120 {offsets = [0, 16], sizes = [8, 8], strides = [1, 1]} : vector<8x32xf32> to vector<8x8xf32>
    %156 = vector.extract_strided_slice %123 {offsets = [0, 16], sizes = [8, 8], strides = [1, 1]} : vector<8x32xf32> to vector<8x8xf32>
    %157 = vector.extract_strided_slice %126 {offsets = [0, 16], sizes = [8, 8], strides = [1, 1]} : vector<8x32xf32> to vector<8x8xf32>
    %cst_50 = arith.constant dense<0.000000e+00> : vector<8x8xf32>
    %158 = tpu.matmul %155, %156, %cst_50 {dimension_numbers = #tpu.dot_dimension_numbers<[1], [1], [0], [0], [0, 0, 1, 0], [], []>} : vector<8x8xf32>, vector<8x8xf32>, vector<8x8xf32> -> vector<8x8xf32>
    %cst_51 = arith.constant dense<0xFF800000> : vector<8xf32>
    %159 = vector.multi_reduction <maximumf>, %158, %cst_51 [1] : vector<8x8xf32> to vector<8xf32>
    %160 = vector.shape_cast %159 : vector<8xf32> to vector<8x1xf32>
    %161 = vector.broadcast %160 : vector<8x1xf32> to vector<8x8xf32>
    %162 = arith.subf %158, %161 : vector<8x8xf32>
    %163 = math.exp %162 : vector<8x8xf32>
    %cst_52 = arith.constant dense<0.000000e+00> : vector<8xf32>
    %164 = vector.multi_reduction <add>, %163, %cst_52 [1] : vector<8x8xf32> to vector<8xf32>
    %165 = vector.shape_cast %164 : vector<8xf32> to vector<8x1xf32>
    %166 = vector.broadcast %165 : vector<8x1xf32> to vector<8x8xf32>
    %167 = arith.divf %163, %166 : vector<8x8xf32>
    %cst_53 = arith.constant dense<0.000000e+00> : vector<8x8xf32>
    %168 = tpu.matmul %167, %157, %cst_53 {dimension_numbers = #tpu.dot_dimension_numbers<[1], [0], [0], [1], [0, 0, 1, 1], [], []>} : vector<8x8xf32>, vector<8x8xf32>, vector<8x8xf32> -> vector<8x8xf32>
    %169 = vector.extract_strided_slice %120 {offsets = [0, 24], sizes = [8, 8], strides = [1, 1]} : vector<8x32xf32> to vector<8x8xf32>
    %170 = vector.extract_strided_slice %123 {offsets = [0, 24], sizes = [8, 8], strides = [1, 1]} : vector<8x32xf32> to vector<8x8xf32>
    %171 = vector.extract_strided_slice %126 {offsets = [0, 24], sizes = [8, 8], strides = [1, 1]} : vector<8x32xf32> to vector<8x8xf32>
    %cst_54 = arith.constant dense<0.000000e+00> : vector<8x8xf32>
    %172 = tpu.matmul %169, %170, %cst_54 {dimension_numbers = #tpu.dot_dimension_numbers<[1], [1], [0], [0], [0, 0, 1, 0], [], []>} : vector<8x8xf32>, vector<8x8xf32>, vector<8x8xf32> -> vector<8x8xf32>
    %cst_55 = arith.constant dense<0xFF800000> : vector<8xf32>
    %173 = vector.multi_reduction <maximumf>, %172, %cst_55 [1] : vector<8x8xf32> to vector<8xf32>
    %174 = vector.shape_cast %173 : vector<8xf32> to vector<8x1xf32>
    %175 = vector.broadcast %174 : vector<8x1xf32> to vector<8x8xf32>
    %176 = arith.subf %172, %175 : vector<8x8xf32>
    %177 = math.exp %176 : vector<8x8xf32>
    %cst_56 = arith.constant dense<0.000000e+00> : vector<8xf32>
    %178 = vector.multi_reduction <add>, %177, %cst_56 [1] : vector<8x8xf32> to vector<8xf32>
    %179 = vector.shape_cast %178 : vector<8xf32> to vector<8x1xf32>
    %180 = vector.broadcast %179 : vector<8x1xf32> to vector<8x8xf32>
    %181 = arith.divf %177, %180 : vector<8x8xf32>
    %cst_57 = arith.constant dense<0.000000e+00> : vector<8x8xf32>
    %182 = tpu.matmul %181, %171, %cst_57 {dimension_numbers = #tpu.dot_dimension_numbers<[1], [0], [0], [1], [0, 0, 1, 1], [], []>} : vector<8x8xf32>, vector<8x8xf32>, vector<8x8xf32> -> vector<8x8xf32>
    %183 = tpu.concatenate %140, %154, %168, %182 in 1 : vector<8x8xf32>, vector<8x8xf32>, vector<8x8xf32>, vector<8x8xf32> -> vector<8x32xf32>
    %cst_58 = arith.constant dense<0.000000e+00> : vector<8x32xf32>
    %184 = tpu.matmul %183, %3, %cst_58 {dimension_numbers = #tpu.dot_dimension_numbers<[1], [0], [0], [1], [0, 0, 1, 1], [], []>} : vector<8x32xf32>, vector<32x32xf32>, vector<8x32xf32> -> vector<8x32xf32>
    %185 = vector.broadcast %8 : vector<1x32xf32> to vector<8x32xf32>
    %186 = arith.addf %184, %185 : vector<8x32xf32>
    %187 = arith.addf %113, %186 : vector<8x32xf32>
    %cst_59 = arith.constant dense<0.000000e+00> : vector<8xf32>
    %188 = vector.multi_reduction <add>, %187, %cst_59 [1] : vector<8x32xf32> to vector<8xf32>
    %189 = vector.shape_cast %188 : vector<8xf32> to vector<8x1xf32>
    %cst_60 = arith.constant 3.200000e+01 : f32
    %190 = vector.broadcast %cst_60 : f32 to vector<8x1xf32>
    %191 = arith.divf %189, %190 : vector<8x1xf32>
    %192 = vector.broadcast %191 : vector<8x1xf32> to vector<8x32xf32>
    %193 = arith.subf %187, %192 : vector<8x32xf32>
    %194 = arith.mulf %193, %193 : vector<8x32xf32>
    %cst_61 = arith.constant dense<0.000000e+00> : vector<8xf32>
    %195 = vector.multi_reduction <add>, %194, %cst_61 [1] : vector<8x32xf32> to vector<8xf32>
    %196 = vector.shape_cast %195 : vector<8xf32> to vector<8x1xf32>
    %cst_62 = arith.constant 3.200000e+01 : f32
    %197 = vector.broadcast %cst_62 : f32 to vector<8x1xf32>
    %198 = arith.divf %196, %197 : vector<8x1xf32>
    %199 = vector.broadcast %191 : vector<8x1xf32> to vector<8x32xf32>
    %200 = arith.subf %187, %199 : vector<8x32xf32>
    %cst_63 = arith.constant 9.99999974E-6 : f32
    %201 = vector.broadcast %cst_63 : f32 to vector<8x1xf32>
    %202 = arith.addf %198, %201 : vector<8x1xf32>
    %203 = math.rsqrt %202 : vector<8x1xf32>
    %204 = vector.broadcast %203 : vector<8x1xf32> to vector<8x32xf32>
    %205 = arith.mulf %200, %204 : vector<8x32xf32>
    %206 = vector.broadcast %9 : vector<1x32xf32> to vector<8x32xf32>
    %207 = arith.mulf %205, %206 : vector<8x32xf32>
    %208 = vector.broadcast %10 : vector<1x32xf32> to vector<8x32xf32>
    %209 = arith.addf %207, %208 : vector<8x32xf32>
    %c0_64 = arith.constant 0 : index
    %c1_65 = arith.constant 1 : index
    %c0_66 = arith.constant 0 : index
    %210 = vector.load %arg5[%c0_64, %c1_65, %c0_66] : memref<8x2x32xf32, #tpu.memory_space<vmem>>, vector<8x1x32xf32>
    %211 = vector.shape_cast %210 : vector<8x1x32xf32> to vector<8x32xf32>
    %212 = vector.shape_cast %209 : vector<8x32xf32> to vector<8x1x32xf32>
    tpu.vector_store %arg5[%c0_64, %c1_65, %c0_66], %212 {strides = array<i32>} : memref<8x2x32xf32, #tpu.memory_space<vmem>>, vector<8x1x32xf32>,
    return
  }
  func.func @transform_0(%arg0: i32) -> (i32, i32, i32) {
    %c0_i32 = arith.constant 0 : i32
    %c0_i32_0 = arith.constant 0 : i32
    %c0_i32_1 = arith.constant 0 : i32
    %c0_i32_2 = arith.constant 0 : i32
    return %c0_i32, %c0_i32_0, %c0_i32_1 : i32, i32, i32
  }
  func.func @transform_1(%arg0: i32) -> (i32, i32, i32) {
    %c0_i32 = arith.constant 0 : i32
    %c0_i32_0 = arith.constant 0 : i32
    %c0_i32_1 = arith.constant 0 : i32
    %c0_i32_2 = arith.constant 0 : i32
    return %c0_i32, %c0_i32_0, %c0_i32_1 : i32, i32, i32
  }
  func.func @transform_2(%arg0: i32) -> (i32, i32) {
    %c0_i32 = arith.constant 0 : i32
    %c0_i32_0 = arith.constant 0 : i32
    %c0_i32_1 = arith.constant 0 : i32
    return %c0_i32, %c0_i32_0 : i32, i32
  }
  func.func @transform_3(%arg0: i32) -> (i32, i32) {
    %c0_i32 = arith.constant 0 : i32
    %c0_i32_0 = arith.constant 0 : i32
    %c0_i32_1 = arith.constant 0 : i32
    return %c0_i32, %c0_i32_0 : i32, i32
  }
  func.func @transform_4(%arg0: i32) -> (i32, i32, i32) {
    %c0_i32 = arith.constant 0 : i32
    %c0_i32_0 = arith.constant 0 : i32
    %c0_i32_1 = arith.constant 0 : i32
    %c0_i32_2 = arith.constant 0 : i32
    return %c0_i32, %c0_i32_0, %c0_i32_1 : i32, i32, i32
  }
}

</mosaic_0001>

<llo_original>
// kernel: self_attention_layer.1
$region0: #{self_attention_layer.1}
  #allocation0 [shape = 'u32[]', space=smem, size = 0x4, offset = 0x4, fixed_abs, tag = 'smem constant byte address 0x4 - core index']
  #allocation1 [shape = 'u32[144,128]{1,0:T(1,128)}', space=vmem, size = 0x12000, scoped, tag = 'internal scratch']
  %s0 = inlined_call_operand.vmem [shape: f32[8,2,32], index: 0, kind: input, shape index: {}]
  %s1 = inlined_call_operand.vmem [shape: f32[8,2,32], index: 1, kind: input, shape index: {}]
  %s2 = inlined_call_operand.vmem [shape: f32[32,128], index: 2, kind: input, shape index: {}]
  %s3 = inlined_call_operand.vmem [shape: f32[8,32], index: 3, kind: input, shape index: {}]
  %s4 = inlined_call_operand.hbm [shape: f32[8,2,32], index: 4, kind: output, shape index: {}]
  %s5 = sld [smem:[#allocation0]]
  $region26: #{self_attention_layer.1} parent=0
    _
  %s7 = ssub.s32 1, %s5
  %s8 = scalar_select 0, %s7, %s5
  $region1: #{self_attention_layer.1} parent=0
    #allocation2 [shape = 'u8[8192]{0}', space=vmem, size = 0x2000, scoped, tag = 'output window, operand 0, single buffered']
    #allocation3 [shape = 's32[1]{0}', space=sflag, size = 0x4, scoped, tag = 'scoped memory for self_attention_layer.1']
    %9 = vsyncpa [#allocation3], 0
    // Predicated region
    $region2: #{self_attention_layer.1} parent=1 // pred_check
      _
    $region3: #{self_attention_layer.1} parent=1 // pred_check_branch
      %11 = sbr.rel (0) target = $region5
    $region4: #{self_attention_layer.1} parent=1 // pred_region
      _
    $region5: #{self_attention_layer.1} parent=1 // pred_fallthru
      _
    // Predicated region
    $region6: #{self_attention_layer.1} parent=1 // pred_check
      _
    $region7: #{self_attention_layer.1} parent=1 // pred_check_branch
      %13 = sbr.rel (0) target = $region9
    $region8: #{self_attention_layer.1} parent=1 // pred_region
      _
    $region9: #{self_attention_layer.1} parent=1 // pred_fallthru
      _
    // Predicated region
    $region10: #{self_attention_layer.1} parent=1 // pred_check
      _
    $region11: #{self_attention_layer.1} parent=1 // pred_check_branch
      %15 = sbr.rel (0) target = $region13
    $region12: #{self_attention_layer.1} parent=1 // pred_region
      _
    $region13: #{self_attention_layer.1} parent=1 // pred_fallthru
      _
    // Predicated region
    $region14: #{self_attention_layer.1} parent=1 // pred_check
      _
    $region15: #{self_attention_layer.1} parent=1 // pred_check_branch
      %17 = sbr.rel (0) target = $region17
    $region16: #{self_attention_layer.1} parent=1 // pred_region
      _
    $region17: #{self_attention_layer.1} parent=1 // pred_fallthru
      _
    %v18 = vld [vmem:[%s2] sm:$0xff]
    %v19 = vld [vmem:[%s2 + $0x8] sm:$0xff]
    %v20 = vld [vmem:[%s2 + $0x10] sm:$0xff]
    %v21 = vld [vmem:[%s2 + $0x18] sm:$0xff]
    %v22 = vld [vmem:[%s3] sm:$0xff]
    %v23 = vld [vmem:[%s0] sm:$0x1]
    %v24 = vld [vmem:[%s0 + $0x2] sm:$0x1]
    %v25 = vld [vmem:[%s0 + $0x4] sm:$0x1]
    %v26 = vld [vmem:[%s0 + $0x6] sm:$0x1]
    %v27 = vld [vmem:[%s0 + $0x8] sm:$0x1]
    %v28 = vld [vmem:[%s0 + $0xa] sm:$0x1]
    %v29 = vld [vmem:[%s0 + $0xc] sm:$0x1]
    %v30 = vld [vmem:[%s0 + $0xe] sm:$0x1]
    %v31 = vld [vmem:[%s1] sm:$0x1]
    %v32 = vld [vmem:[%s1 + $0x2] sm:$0x1]
    %v33 = vld [vmem:[%s1 + $0x4] sm:$0x1]
    %v34 = vld [vmem:[%s1 + $0x6] sm:$0x1]
    %v35 = vld [vmem:[%s1 + $0x8] sm:$0x1]
    %v36 = vld [vmem:[%s1 + $0xa] sm:$0x1]
    %v37 = vld [vmem:[%s1 + $0xc] sm:$0x1]
    %v38 = vld [vmem:[%s1 + $0xe] sm:$0x1]
    %v39 = vadd.f32 %v23, %v31
    %v40 = vadd.f32 %v24, %v32
    %v41 = vadd.f32 %v25, %v33
    %v42 = vadd.f32 %v26, %v34
    %v43 = vadd.f32 %v27, %v35
    %v44 = vadd.f32 %v28, %v36
    %v45 = vadd.f32 %v29, %v37
    %v46 = vadd.f32 %v30, %v38
    %v55 = vrot.slane %v40, 7
    %vm56 = vcmask 1041409
    %v57 = vsel %vm56, %v55, %v39
    %v58 = vrot.slane %v41, 6
    %vm59 = vcmask 1042434
    %v60 = vsel %vm59, %v58, %v57
    %v61 = vrot.slane %v42, 5
    %vm62 = vcmask 1043459
    %v63 = vsel %vm62, %v61, %v60
    %v64 = vrot.slane %v43, 4
    %vm65 = vcmask 1044484
    %v66 = vsel %vm65, %v64, %v63
    %v67 = vrot.slane %v44, 3
    %vm68 = vcmask 1045509
    %v69 = vsel %vm68, %v67, %v66
    %v70 = vrot.slane %v45, 2
    %vm71 = vcmask 1046534
    %v72 = vsel %vm71, %v70, %v69
    %v73 = vrot.slane %v46, 1
    %vm74 = vcmask 1047559
    %v75 = vsel %vm74, %v73, %v72
    %vm76 = vcmask 261120
    %v77 = vsel %vm76, %v75, 0
    %79 = vmatprep.subr.mxu0 0.0
    %80 = vmatpush1.msra.mxu0 %v18
    %81 = vmatprep.subr.mxu0 0.0
    %82 = vmatpush1.msra.mxu0 %v19
    %83 = vmatprep.subr.mxu0 0.0
    %84 = vmatpush1.msra.mxu0 %v20
    %85 = vmatprep.subr.mxu0 0.0
    %86 = vmatpush1.msra.mxu0 %v21
    %87 = vmatprep.subr.mxu0 0.0
    %88 = vmatpush1.msra.mxu0 0.0
    %89 = vmatprep.subr.mxu0 0.0
    %90 = vmatpush1.msra.mxu0 0.0
    %91 = vmatprep.subr.mxu0 0.0
    %92 = vmatpush1.msra.mxu0 0.0
    %93 = vmatprep.subr.mxu0 0.0
    %94 = vmatpush1.msra.mxu0 0.0
    %95 = vmatprep.subr.mxu0 0.0
    %96 = vmatpush1.msra.mxu0 0.0
    %97 = vmatprep.subr.mxu0 0.0
    %98 = vmatpush1.msra.mxu0 0.0
    %99 = vmatprep.subr.mxu0 0.0
    %100 = vmatpush1.msra.mxu0 0.0
    %101 = vmatprep.subr.mxu0 0.0
    %102 = vmatpush1.msra.mxu0 0.0
    %103 = vmatprep.subr.mxu0 0.0
    %104 = vmatpush1.msra.mxu0 0.0
    %105 = vmatprep.subr.mxu0 0.0
    %106 = vmatpush1.msra.mxu0 0.0
    %107 = vmatprep.subr.mxu0 0.0
    %108 = vmatpush1.msra.mxu0 0.0
    %109 = vmatprep.subr.mxu0 0.0
    %110 = vmatpush1.msra.mxu0 0.0
    %111 = vmatprep.subr.mxu0 0.0
    %112 = vmatpush1.msra.mxu0 0.0
    %113 = vmatprep.subr.mxu0 0.0
    %114 = vmatpush1.msra.mxu0 0.0
    %115 = vmatprep.subr.mxu0 0.0
    %116 = vmatpush1.msra.mxu0 0.0
    %117 = vmatprep.subr.mxu0 0.0
    %118 = vmatpush1.msra.mxu0 0.0
    %119 = vmatprep.subr.mxu0 0.0
    %120 = vmatpush1.msra.mxu0 0.0
    %121 = vmatprep.subr.mxu0 0.0
    %122 = vmatpush1.msra.mxu0 0.0
    %123 = vmatprep.subr.mxu0 0.0
    %124 = vmatpush1.msra.mxu0 0.0
    %125 = vmatprep.subr.mxu0 0.0
    %126 = vmatpush1.msra.mxu0 0.0
    %127 = vmatprep.subr.mxu0 0.0
    %128 = vmatpush1.msra.mxu0 0.0
    %129 = vmatprep.subr.mxu0 0.0
    %130 = vmatpush1.msra.mxu0 0.0
    %131 = vmatprep.subr.mxu0 0.0
    %132 = vmatpush1.msra.mxu0 0.0
    %133 = vmatprep.subr.mxu0 0.0
    %134 = vmatpush1.msra.mxu0 0.0
    %135 = vmatprep.subr.mxu0 0.0
    %136 = vmatpush1.msra.mxu0 0.0
    %137 = vmatprep.subr.mxu0 0.0
    %138 = vmatpush1.msra.mxu0 0.0
    %139 = vmatprep.subr.mxu0 0.0
    %140 = vmatpush1.msra.mxu0 0.0
    %141 = vmatprep.subr.mxu0 0.0
    %142 = vmatpush1.msra.mxu0 0.0
    %143 = vmatprep.mubr.f32.mxu0 0.0
    %144 = vmatmul.mubr.f32.gmra.mrb[0].mxu0 %v77
    %v145 = vpop.f32.mrb[0].mxu0
    %v146 = vadd.f32 0.0, %v145
    %v147 = vpop.f32.mrb[0].mxu0
    %148 = vdwg.mxu0
    %v149 = vlaneseq
    %v150 = vshrl.u32 %v149, 7
    %v151 = vsub.s32 0, %v150
    %v152 = vrot.slane %v22, %v151
    %v153 = vadd.f32 %v146, %v152
    %v154 = vlaneseq
    %v155 = vshrl.u32 %v154, 7
    %v156 = vsub.s32 1, %v155
    %v157 = vrot.slane %v22, %v156
    %159 = vrot.lane.b32.xlu0 %v157, 32
    %v160 = vpop.permute.xlu0 %159
    %v162 = vadd.f32 %v146, %v160
    %v163 = vlaneseq
    %v164 = vshrl.u32 %v163, 7
    %v165 = vsub.s32 2, %v164
    %v166 = vrot.slane %v22, %v165
    %v175 = vrot.slane %v24, 7
    %v176 = vsel %vm56, %v175, %v23
    %v177 = vrot.slane %v25, 6
    %v178 = vsel %vm59, %v177, %v176
    %v179 = vrot.slane %v26, 5
    %v180 = vsel %vm62, %v179, %v178
    %v181 = vrot.slane %v27, 4
    %v182 = vsel %vm65, %v181, %v180
    %v183 = vrot.slane %v28, 3
    %v184 = vsel %vm68, %v183, %v182
    %v185 = vrot.slane %v29, 2
    %v186 = vsel %vm71, %v185, %v184
    %v187 = vrot.slane %v30, 1
    %v188 = vsel %vm74, %v187, %v186
    %193 = vrot.lane.b32.xlu0 %v18, 64
    %v194 = vpop.permute.xlu0 %193
    %195 = vrot.lane.b32.xlu0 %v19, 64
    %v196 = vpop.permute.xlu0 %195
    %197 = vrot.lane.b32.xlu0 %v20, 64
    %v198 = vpop.permute.xlu0 %197
    %199 = vrot.lane.b32.xlu0 %v21, 64
    %v200 = vpop.permute.xlu0 %199
    %v205 = vsel %vm76, %v188, 0
    %207 = vmatprep.subr.mxu0 0.0
    %208 = vmatpush1.msra.mxu0 %v194
    %209 = vmatprep.subr.mxu0 0.0
    %210 = vmatpush1.msra.mxu0 %v196
    %211 = vmatprep.subr.mxu0 0.0
    %212 = vmatpush1.msra.mxu0 %v198
    %213 = vmatprep.subr.mxu0 0.0
    %214 = vmatpush1.msra.mxu0 %v200
    %215 = vmatprep.subr.mxu0 0.0
    %216 = vmatpush1.msra.mxu0 0.0
    %217 = vmatprep.subr.mxu0 0.0
    %218 = vmatpush1.msra.mxu0 0.0
    %219 = vmatprep.subr.mxu0 0.0
    %220 = vmatpush1.msra.mxu0 0.0
    %221 = vmatprep.subr.mxu0 0.0
    %222 = vmatpush1.msra.mxu0 0.0
    %223 = vmatprep.subr.mxu0 0.0
    %224 = vmatpush1.msra.mxu0 0.0
    %225 = vmatprep.subr.mxu0 0.0
    %226 = vmatpush1.msra.mxu0 0.0
    %227 = vmatprep.subr.mxu0 0.0
    %228 = vmatpush1.msra.mxu0 0.0
    %229 = vmatprep.subr.mxu0 0.0
    %230 = vmatpush1.msra.mxu0 0.0
    %231 = vmatprep.subr.mxu0 0.0
    %232 = vmatpush1.msra.mxu0 0.0
    %233 = vmatprep.subr.mxu0 0.0
    %234 = vmatpush1.msra.mxu0 0.0
    %235 = vmatprep.subr.mxu0 0.0
    %236 = vmatpush1.msra.mxu0 0.0
    %237 = vmatprep.subr.mxu0 0.0
    %238 = vmatpush1.msra.mxu0 0.0
    %239 = vmatprep.subr.mxu0 0.0
    %240 = vmatpush1.msra.mxu0 0.0
    %241 = vmatprep.subr.mxu0 0.0
    %242 = vmatpush1.msra.mxu0 0.0
    %243 = vmatprep.subr.mxu0 0.0
    %244 = vmatpush1.msra.mxu0 0.0
    %245 = vmatprep.subr.mxu0 0.0
    %246 = vmatpush1.msra.mxu0 0.0
    %247 = vmatprep.subr.mxu0 0.0
    %248 = vmatpush1.msra.mxu0 0.0
    %249 = vmatprep.subr.mxu0 0.0
    %250 = vmatpush1.msra.mxu0 0.0
    %251 = vmatprep.subr.mxu0 0.0
    %252 = vmatpush1.msra.mxu0 0.0
    %253 = vmatprep.subr.mxu0 0.0
    %254 = vmatpush1.msra.mxu0 0.0
    %255 = vmatprep.subr.mxu0 0.0
    %256 = vmatpush1.msra.mxu0 0.0
    %257 = vmatprep.subr.mxu0 0.0
    %258 = vmatpush1.msra.mxu0 0.0
    %259 = vmatprep.subr.mxu0 0.0
    %260 = vmatpush1.msra.mxu0 0.0
    %261 = vmatprep.subr.mxu0 0.0
    %262 = vmatpush1.msra.mxu0 0.0
    %263 = vmatprep.subr.mxu0 0.0
    %264 = vmatpush1.msra.mxu0 0.0
    %265 = vmatprep.subr.mxu0 0.0
    %266 = vmatpush1.msra.mxu0 0.0
    %267 = vmatprep.subr.mxu0 0.0
    %268 = vmatpush1.msra.mxu0 0.0
    %269 = vmatprep.subr.mxu0 0.0
    %270 = vmatpush1.msra.mxu0 0.0
    %271 = vmatprep.mubr.f32.mxu0 0.0
    %272 = vmatmul.mubr.f32.gmra.mrb[0].mxu0 %v205
    %v273 = vpop.f32.mrb[0].mxu0
    %v274 = vadd.f32 %v166, %v273
    %v275 = vpop.f32.mrb[0].mxu0
    %276 = vdwg.mxu0
    %278 = vrot.lane.b32.xlu0 %v162, 96
    %v279 = vpop.permute.xlu0 %278
    %vm280 = vcmask 64512
    %v282 = vsel %vm280, %v153, 0
    %v284 = vsel %vm280, %v279, 0
    %286 = vmatprep.subr.mxu0 0.0
    %287 = vmatpush1.xpose.msra.mxu0 %v284
    %288 = vmatprep.subr.mxu0 0.0
    %289 = vmatpush1.xpose.msra.mxu0 0.0
    %290 = vmatprep.subr.mxu0 0.0
    %291 = vmatpush1.xpose.msra.mxu0 0.0
    %292 = vmatprep.subr.mxu0 0.0
    %293 = vmatpush1.xpose.msra.mxu0 0.0
    %294 = vmatprep.subr.mxu0 0.0
    %295 = vmatpush1.xpose.msra.mxu0 0.0
    %296 = vmatprep.subr.mxu0 0.0
    %297 = vmatpush1.xpose.msra.mxu0 0.0
    %298 = vmatprep.subr.mxu0 0.0
    %299 = vmatpush1.xpose.msra.mxu0 0.0
    %300 = vmatprep.subr.mxu0 0.0
    %301 = vmatpush1.xpose.msra.mxu0 0.0
    %302 = vmatprep.subr.mxu0 0.0
    %303 = vmatpush1.xpose.msra.mxu0 0.0
    %304 = vmatprep.subr.mxu0 0.0
    %305 = vmatpush1.xpose.msra.mxu0 0.0
    %306 = vmatprep.subr.mxu0 0.0
    %307 = vmatpush1.xpose.msra.mxu0 0.0
    %308 = vmatprep.subr.mxu0 0.0
    %309 = vmatpush1.xpose.msra.mxu0 0.0
    %310 = vmatprep.subr.mxu0 0.0
    %311 = vmatpush1.xpose.msra.mxu0 0.0
    %312 = vmatprep.subr.mxu0 0.0
    %313 = vmatpush1.xpose.msra.mxu0 0.0
    %314 = vmatprep.subr.mxu0 0.0
    %315 = vmatpush1.xpose.msra.mxu0 0.0
    %316 = vmatprep.subr.mxu0 0.0
    %317 = vmatpush1.xpose.msra.mxu0 0.0
    %318 = vmatprep.subr.mxu0 0.0
    %319 = vmatpush1.xpose.msra.mxu0 0.0
    %320 = vmatprep.subr.mxu0 0.0
    %321 = vmatpush1.xpose.msra.mxu0 0.0
    %322 = vmatprep.subr.mxu0 0.0
    %323 = vmatpush1.xpose.msra.mxu0 0.0
    %324 = vmatprep.subr.mxu0 0.0
    %325 = vmatpush1.xpose.msra.mxu0 0.0
    %326 = vmatprep.subr.mxu0 0.0
    %327 = vmatpush1.xpose.msra.mxu0 0.0
    %328 = vmatprep.subr.mxu0 0.0
    %329 = vmatpush1.xpose.msra.mxu0 0.0
    %330 = vmatprep.subr.mxu0 0.0
    %331 = vmatpush1.xpose.msra.mxu0 0.0
    %332 = vmatprep.subr.mxu0 0.0
    %333 = vmatpush1.xpose.msra.mxu0 0.0
    %334 = vmatprep.subr.mxu0 0.0
    %335 = vmatpush1.xpose.msra.mxu0 0.0
    %336 = vmatprep.subr.mxu0 0.0
    %337 = vmatpush1.xpose.msra.mxu0 0.0
    %338 = vmatprep.subr.mxu0 0.0
    %339 = vmatpush1.xpose.msra.mxu0 0.0
    %340 = vmatprep.subr.mxu0 0.0
    %341 = vmatpush1.xpose.msra.mxu0 0.0
    %342 = vmatprep.subr.mxu0 0.0
    %343 = vmatpush1.xpose.msra.mxu0 0.0
    %344 = vmatprep.subr.mxu0 0.0
    %345 = vmatpush1.xpose.msra.mxu0 0.0
    %346 = vmatprep.subr.mxu0 0.0
    %347 = vmatpush1.xpose.msra.mxu0 0.0
    %348 = vmatprep.subr.mxu0 0.0
    %349 = vmatpush1.xpose.msra.mxu0 0.0
    %350 = vmatprep.mubr.f32.mxu0 0.0
    %351 = vmatmul.mubr.f32.gmra.mrb[0].mxu0 %v282
    %v352 = vpop.f32.mrb[0].mxu0
    %v353 = vadd.f32 0.0, %v352
    %v354 = vpop.f32.mrb[0].mxu0
    %355 = vdwg.mxu0
    %v356 = vsel %vm280, %v353, -inf
    %357 = vmax.xlane.f32.xlu0 %v356
    %v358 = vpop.xlane.xlu0 %357
    %v359 = vsub.f32 %v353, %v358
    %v360 = vmul.f32 %v359, 1.442695
    %v361 = vpow.pop %v360
    %v362 = vsel %vm280, %v361, 0.0
    %363 = vadd.xlane.f32.xlu0 %v362
    %v364 = vpop.xlane.xlu0 %363
    %v365 = vrcp.pop %v364
    %v366 = vmul.f32 %v361, %v365
    %v368 = vsel %vm280, %v366, 0
    %370 = vmatprep.subr.mxu0 0.0
    %371 = vmatpush1.msra.mxu0 %v274
    %372 = vmatprep.subr.mxu0 0.0
    %373 = vmatpush1.msra.mxu0 0.0
    %374 = vmatprep.subr.mxu0 0.0
    %375 = vmatpush1.msra.mxu0 0.0
    %376 = vmatprep.subr.mxu0 0.0
    %377 = vmatpush1.msra.mxu0 0.0
    %378 = vmatprep.subr.mxu0 0.0
    %379 = vmatpush1.msra.mxu0 0.0
    %380 = vmatprep.subr.mxu0 0.0
    %381 = vmatpush1.msra.mxu0 0.0
    %382 = vmatprep.subr.mxu0 0.0
    %383 = vmatpush1.msra.mxu0 0.0
    %384 = vmatprep.subr.mxu0 0.0
    %385 = vmatpush1.msra.mxu0 0.0
    %386 = vmatprep.subr.mxu0 0.0
    %387 = vmatpush1.msra.mxu0 0.0
    %388 = vmatprep.subr.mxu0 0.0
    %389 = vmatpush1.msra.mxu0 0.0
    %390 = vmatprep.subr.mxu0 0.0
    %391 = vmatpush1.msra.mxu0 0.0
    %392 = vmatprep.subr.mxu0 0.0
    %393 = vmatpush1.msra.mxu0 0.0
    %394 = vmatprep.subr.mxu0 0.0
    %395 = vmatpush1.msra.mxu0 0.0
    %396 = vmatprep.subr.mxu0 0.0
    %397 = vmatpush1.msra.mxu0 0.0
    %398 = vmatprep.subr.mxu0 0.0
    %399 = vmatpush1.msra.mxu0 0.0
    %400 = vmatprep.subr.mxu0 0.0
    %401 = vmatpush1.msra.mxu0 0.0
    %402 = vmatprep.subr.mxu0 0.0
    %403 = vmatpush1.msra.mxu0 0.0
    %404 = vmatprep.subr.mxu0 0.0
    %405 = vmatpush1.msra.mxu0 0.0
    %406 = vmatprep.subr.mxu0 0.0
    %407 = vmatpush1.msra.mxu0 0.0
    %408 = vmatprep.subr.mxu0 0.0
    %409 = vmatpush1.msra.mxu0 0.0
    %410 = vmatprep.subr.mxu0 0.0
    %411 = vmatpush1.msra.mxu0 0.0
    %412 = vmatprep.subr.mxu0 0.0
    %413 = vmatpush1.msra.mxu0 0.0
    %414 = vmatprep.subr.mxu0 0.0
    %415 = vmatpush1.msra.mxu0 0.0
    %416 = vmatprep.subr.mxu0 0.0
    %417 = vmatpush1.msra.mxu0 0.0
    %418 = vmatprep.subr.mxu0 0.0
    %419 = vmatpush1.msra.mxu0 0.0
    %420 = vmatprep.subr.mxu0 0.0
    %421 = vmatpush1.msra.mxu0 0.0
    %422 = vmatprep.subr.mxu0 0.0
    %423 = vmatpush1.msra.mxu0 0.0
    %424 = vmatprep.subr.mxu0 0.0
    %425 = vmatpush1.msra.mxu0 0.0
    %426 = vmatprep.subr.mxu0 0.0
    %427 = vmatpush1.msra.mxu0 0.0
    %428 = vmatprep.subr.mxu0 0.0
    %429 = vmatpush1.msra.mxu0 0.0
    %430 = vmatprep.subr.mxu0 0.0
    %431 = vmatpush1.msra.mxu0 0.0
    %432 = vmatprep.subr.mxu0 0.0
    %433 = vmatpush1.msra.mxu0 0.0
    %434 = vmatprep.mubr.f32.mxu0 0.0
    %435 = vmatmul.mubr.f32.gmra.mrb[0].mxu0 %v368
    %v436 = vpop.f32.mrb[0].mxu0
    %v437 = vadd.f32 0.0, %v436
    %v438 = vpop.f32.mrb[0].mxu0
    %439 = vdwg.mxu0
    %440 = vrot.lane.b32.xlu0 %v153, 120
    %v441 = vpop.permute.xlu0 %440
    %442 = vrot.lane.b32.xlu0 %v162, 88
    %v443 = vpop.permute.xlu0 %442
    %v444 = vsel %vm280, %v441, 0
    %v446 = vsel %vm280, %v443, 0
    %448 = vmatprep.subr.mxu0 0.0
    %449 = vmatpush1.xpose.msra.mxu0 %v446
    %450 = vmatprep.subr.mxu0 0.0
    %451 = vmatpush1.xpose.msra.mxu0 0.0
    %452 = vmatprep.subr.mxu0 0.0
    %453 = vmatpush1.xpose.msra.mxu0 0.0
    %454 = vmatprep.subr.mxu0 0.0
    %455 = vmatpush1.xpose.msra.mxu0 0.0
    %456 = vmatprep.subr.mxu0 0.0
    %457 = vmatpush1.xpose.msra.mxu0 0.0
    %458 = vmatprep.subr.mxu0 0.0
    %459 = vmatpush1.xpose.msra.mxu0 0.0
    %460 = vmatprep.subr.mxu0 0.0
    %461 = vmatpush1.xpose.msra.mxu0 0.0
    %462 = vmatprep.subr.mxu0 0.0
    %463 = vmatpush1.xpose.msra.mxu0 0.0
    %464 = vmatprep.subr.mxu0 0.0
    %465 = vmatpush1.xpose.msra.mxu0 0.0
    %466 = vmatprep.subr.mxu0 0.0
    %467 = vmatpush1.xpose.msra.mxu0 0.0
    %468 = vmatprep.subr.mxu0 0.0
    %469 = vmatpush1.xpose.msra.mxu0 0.0
    %470 = vmatprep.subr.mxu0 0.0
    %471 = vmatpush1.xpose.msra.mxu0 0.0
    %472 = vmatprep.subr.mxu0 0.0
    %473 = vmatpush1.xpose.msra.mxu0 0.0
    %474 = vmatprep.subr.mxu0 0.0
    %475 = vmatpush1.xpose.msra.mxu0 0.0
    %476 = vmatprep.subr.mxu0 0.0
    %477 = vmatpush1.xpose.msra.mxu0 0.0
    %478 = vmatprep.subr.mxu0 0.0
    %479 = vmatpush1.xpose.msra.mxu0 0.0
    %480 = vmatprep.subr.mxu0 0.0
    %481 = vmatpush1.xpose.msra.mxu0 0.0
    %482 = vmatprep.subr.mxu0 0.0
    %483 = vmatpush1.xpose.msra.mxu0 0.0
    %484 = vmatprep.subr.mxu0 0.0
    %485 = vmatpush1.xpose.msra.mxu0 0.0
    %486 = vmatprep.subr.mxu0 0.0
    %487 = vmatpush1.xpose.msra.mxu0 0.0
    %488 = vmatprep.subr.mxu0 0.0
    %489 = vmatpush1.xpose.msra.mxu0 0.0
    %490 = vmatprep.subr.mxu0 0.0
    %491 = vmatpush1.xpose.msra.mxu0 0.0
    %492 = vmatprep.subr.mxu0 0.0
    %493 = vmatpush1.xpose.msra.mxu0 0.0
    %494 = vmatprep.subr.mxu0 0.0
    %495 = vmatpush1.xpose.msra.mxu0 0.0
    %496 = vmatprep.subr.mxu0 0.0
    %497 = vmatpush1.xpose.msra.mxu0 0.0
    %498 = vmatprep.subr.mxu0 0.0
    %499 = vmatpush1.xpose.msra.mxu0 0.0
    %500 = vmatprep.subr.mxu0 0.0
    %501 = vmatpush1.xpose.msra.mxu0 0.0
    %502 = vmatprep.subr.mxu0 0.0
    %503 = vmatpush1.xpose.msra.mxu0 0.0
    %504 = vmatprep.subr.mxu0 0.0
    %505 = vmatpush1.xpose.msra.mxu0 0.0
    %506 = vmatprep.subr.mxu0 0.0
    %507 = vmatpush1.xpose.msra.mxu0 0.0
    %508 = vmatprep.subr.mxu0 0.0
    %509 = vmatpush1.xpose.msra.mxu0 0.0
    %510 = vmatprep.subr.mxu0 0.0
    %511 = vmatpush1.xpose.msra.mxu0 0.0
    %512 = vmatprep.mubr.f32.mxu0 0.0
    %513 = vmatmul.mubr.f32.gmra.mrb[0].mxu0 %v444
    %v514 = vpop.f32.mrb[0].mxu0
    %v515 = vadd.f32 0.0, %v514
    %v516 = vpop.f32.mrb[0].mxu0
    %517 = vdwg.mxu0
    %v518 = vsel %vm280, %v515, -inf
    %519 = vmax.xlane.f32.xlu0 %v518
    %v520 = vpop.xlane.xlu0 %519
    %v521 = vsub.f32 %v515, %v520
    %v522 = vmul.f32 %v521, 1.442695
    %v523 = vpow.pop %v522
    %v524 = vsel %vm280, %v523, 0.0
    %525 = vadd.xlane.f32.xlu0 %v524
    %v526 = vpop.xlane.xlu0 %525
    %v527 = vrcp.pop %v526
    %v528 = vmul.f32 %v523, %v527
    %530 = vrot.lane.b32.xlu0 %v274, 120
    %v531 = vpop.permute.xlu0 %530
    %v534 = vsel %vm280, %v528, 0
    %536 = vmatprep.subr.mxu0 0.0
    %537 = vmatpush1.msra.mxu0 %v531
    %538 = vmatprep.subr.mxu0 0.0
    %539 = vmatpush1.msra.mxu0 0.0
    %540 = vmatprep.subr.mxu0 0.0
    %541 = vmatpush1.msra.mxu0 0.0
    %542 = vmatprep.subr.mxu0 0.0
    %543 = vmatpush1.msra.mxu0 0.0
    %544 = vmatprep.subr.mxu0 0.0
    %545 = vmatpush1.msra.mxu0 0.0
    %546 = vmatprep.subr.mxu0 0.0
    %547 = vmatpush1.msra.mxu0 0.0
    %548 = vmatprep.subr.mxu0 0.0
    %549 = vmatpush1.msra.mxu0 0.0
    %550 = vmatprep.subr.mxu0 0.0
    %551 = vmatpush1.msra.mxu0 0.0
    %552 = vmatprep.subr.mxu0 0.0
    %553 = vmatpush1.msra.mxu0 0.0
    %554 = vmatprep.subr.mxu0 0.0
    %555 = vmatpush1.msra.mxu0 0.0
    %556 = vmatprep.subr.mxu0 0.0
    %557 = vmatpush1.msra.mxu0 0.0
    %558 = vmatprep.subr.mxu0 0.0
    %559 = vmatpush1.msra.mxu0 0.0
    %560 = vmatprep.subr.mxu0 0.0
    %561 = vmatpush1.msra.mxu0 0.0
    %562 = vmatprep.subr.mxu0 0.0
    %563 = vmatpush1.msra.mxu0 0.0
    %564 = vmatprep.subr.mxu0 0.0
    %565 = vmatpush1.msra.mxu0 0.0
    %566 = vmatprep.subr.mxu0 0.0
    %567 = vmatpush1.msra.mxu0 0.0
    %568 = vmatprep.subr.mxu0 0.0
    %569 = vmatpush1.msra.mxu0 0.0
    %570 = vmatprep.subr.mxu0 0.0
    %571 = vmatpush1.msra.mxu0 0.0
    %572 = vmatprep.subr.mxu0 0.0
    %573 = vmatpush1.msra.mxu0 0.0
    %574 = vmatprep.subr.mxu0 0.0
    %575 = vmatpush1.msra.mxu0 0.0
    %576 = vmatprep.subr.mxu0 0.0
    %577 = vmatpush1.msra.mxu0 0.0
    %578 = vmatprep.subr.mxu0 0.0
    %579 = vmatpush1.msra.mxu0 0.0
    %580 = vmatprep.subr.mxu0 0.0
    %581 = vmatpush1.msra.mxu0 0.0
    %582 = vmatprep.subr.mxu0 0.0
    %583 = vmatpush1.msra.mxu0 0.0
    %584 = vmatprep.subr.mxu0 0.0
    %585 = vmatpush1.msra.mxu0 0.0
    %586 = vmatprep.subr.mxu0 0.0
    %587 = vmatpush1.msra.mxu0 0.0
    %588 = vmatprep.subr.mxu0 0.0
    %589 = vmatpush1.msra.mxu0 0.0
    %590 = vmatprep.subr.mxu0 0.0
    %591 = vmatpush1.msra.mxu0 0.0
    %592 = vmatprep.subr.mxu0 0.0
    %593 = vmatpush1.msra.mxu0 0.0
    %594 = vmatprep.subr.mxu0 0.0
    %595 = vmatpush1.msra.mxu0 0.0
    %596 = vmatprep.subr.mxu0 0.0
    %597 = vmatpush1.msra.mxu0 0.0
    %598 = vmatprep.subr.mxu0 0.0
    %599 = vmatpush1.msra.mxu0 0.0
    %600 = vmatprep.mubr.f32.mxu0 0.0
    %601 = vmatmul.mubr.f32.gmra.mrb[0].mxu0 %v534
    %v602 = vpop.f32.mrb[0].mxu0
    %v603 = vadd.f32 0.0, %v602
    %v604 = vpop.f32.mrb[0].mxu0
    %605 = vdwg.mxu0
    %606 = vrot.lane.b32.xlu0 %v153, 112
    %v607 = vpop.permute.xlu0 %606
    %608 = vrot.lane.b32.xlu0 %v162, 80
    %v609 = vpop.permute.xlu0 %608
    %v610 = vsel %vm280, %v607, 0
    %v612 = vsel %vm280, %v609, 0
    %614 = vmatprep.subr.mxu0 0.0
    %615 = vmatpush1.xpose.msra.mxu0 %v612
    %616 = vmatprep.subr.mxu0 0.0
    %617 = vmatpush1.xpose.msra.mxu0 0.0
    %618 = vmatprep.subr.mxu0 0.0
    %619 = vmatpush1.xpose.msra.mxu0 0.0
    %620 = vmatprep.subr.mxu0 0.0
    %621 = vmatpush1.xpose.msra.mxu0 0.0
    %622 = vmatprep.subr.mxu0 0.0
    %623 = vmatpush1.xpose.msra.mxu0 0.0
    %624 = vmatprep.subr.mxu0 0.0
    %625 = vmatpush1.xpose.msra.mxu0 0.0
    %626 = vmatprep.subr.mxu0 0.0
    %627 = vmatpush1.xpose.msra.mxu0 0.0
    %628 = vmatprep.subr.mxu0 0.0
    %629 = vmatpush1.xpose.msra.mxu0 0.0
    %630 = vmatprep.subr.mxu0 0.0
    %631 = vmatpush1.xpose.msra.mxu0 0.0
    %632 = vmatprep.subr.mxu0 0.0
    %633 = vmatpush1.xpose.msra.mxu0 0.0
    %634 = vmatprep.subr.mxu0 0.0
    %635 = vmatpush1.xpose.msra.mxu0 0.0
    %636 = vmatprep.subr.mxu0 0.0
    %637 = vmatpush1.xpose.msra.mxu0 0.0
    %638 = vmatprep.subr.mxu0 0.0
    %639 = vmatpush1.xpose.msra.mxu0 0.0
    %640 = vmatprep.subr.mxu0 0.0
    %641 = vmatpush1.xpose.msra.mxu0 0.0
    %642 = vmatprep.subr.mxu0 0.0
    %643 = vmatpush1.xpose.msra.mxu0 0.0
    %644 = vmatprep.subr.mxu0 0.0
    %645 = vmatpush1.xpose.msra.mxu0 0.0
    %646 = vmatprep.subr.mxu0 0.0
    %647 = vmatpush1.xpose.msra.mxu0 0.0
    %648 = vmatprep.subr.mxu0 0.0
    %649 = vmatpush1.xpose.msra.mxu0 0.0
    %650 = vmatprep.subr.mxu0 0.0
    %651 = vmatpush1.xpose.msra.mxu0 0.0
    %652 = vmatprep.subr.mxu0 0.0
    %653 = vmatpush1.xpose.msra.mxu0 0.0
    %654 = vmatprep.subr.mxu0 0.0
    %655 = vmatpush1.xpose.msra.mxu0 0.0
    %656 = vmatprep.subr.mxu0 0.0
    %657 = vmatpush1.xpose.msra.mxu0 0.0
    %658 = vmatprep.subr.mxu0 0.0
    %659 = vmatpush1.xpose.msra.mxu0 0.0
    %660 = vmatprep.subr.mxu0 0.0
    %661 = vmatpush1.xpose.msra.mxu0 0.0
    %662 = vmatprep.subr.mxu0 0.0
    %663 = vmatpush1.xpose.msra.mxu0 0.0
    %664 = vmatprep.subr.mxu0 0.0
    %665 = vmatpush1.xpose.msra.mxu0 0.0
    %666 = vmatprep.subr.mxu0 0.0
    %667 = vmatpush1.xpose.msra.mxu0 0.0
    %668 = vmatprep.subr.mxu0 0.0
    %669 = vmatpush1.xpose.msra.mxu0 0.0
    %670 = vmatprep.subr.mxu0 0.0
    %671 = vmatpush1.xpose.msra.mxu0 0.0
    %672 = vmatprep.subr.mxu0 0.0
    %673 = vmatpush1.xpose.msra.mxu0 0.0
    %674 = vmatprep.subr.mxu0 0.0
    %675 = vmatpush1.xpose.msra.mxu0 0.0
    %676 = vmatprep.subr.mxu0 0.0
    %677 = vmatpush1.xpose.msra.mxu0 0.0
    %678 = vmatprep.mubr.f32.mxu0 0.0
    %679 = vmatmul.mubr.f32.gmra.mrb[0].mxu0 %v610
    %v680 = vpop.f32.mrb[0].mxu0
    %v681 = vadd.f32 0.0, %v680
    %v682 = vpop.f32.mrb[0].mxu0
    %683 = vdwg.mxu0
    %v684 = vsel %vm280, %v681, -inf
    %685 = vmax.xlane.f32.xlu0 %v684
    %v686 = vpop.xlane.xlu0 %685
    %v687 = vsub.f32 %v681, %v686
    %v688 = vmul.f32 %v687, 1.442695
    %v689 = vpow.pop %v688
    %v690 = vsel %vm280, %v689, 0.0
    %691 = vadd.xlane.f32.xlu0 %v690
    %v692 = vpop.xlane.xlu0 %691
    %v693 = vrcp.pop %v692
    %v694 = vmul.f32 %v689, %v693
    %695 = vrot.lane.b32.xlu0 %v274, 112
    %v696 = vpop.permute.xlu0 %695
    %v699 = vsel %vm280, %v694, 0
    %701 = vmatprep.subr.mxu0 0.0
    %702 = vmatpush1.msra.mxu0 %v696
    %703 = vmatprep.subr.mxu0 0.0
    %704 = vmatpush1.msra.mxu0 0.0
    %705 = vmatprep.subr.mxu0 0.0
    %706 = vmatpush1.msra.mxu0 0.0
    %707 = vmatprep.subr.mxu0 0.0
    %708 = vmatpush1.msra.mxu0 0.0
    %709 = vmatprep.subr.mxu0 0.0
    %710 = vmatpush1.msra.mxu0 0.0
    %711 = vmatprep.subr.mxu0 0.0
    %712 = vmatpush1.msra.mxu0 0.0
    %713 = vmatprep.subr.mxu0 0.0
    %714 = vmatpush1.msra.mxu0 0.0
    %715 = vmatprep.subr.mxu0 0.0
    %716 = vmatpush1.msra.mxu0 0.0
    %717 = vmatprep.subr.mxu0 0.0
    %718 = vmatpush1.msra.mxu0 0.0
    %719 = vmatprep.subr.mxu0 0.0
    %720 = vmatpush1.msra.mxu0 0.0
    %721 = vmatprep.subr.mxu0 0.0
    %722 = vmatpush1.msra.mxu0 0.0
    %723 = vmatprep.subr.mxu0 0.0
    %724 = vmatpush1.msra.mxu0 0.0
    %725 = vmatprep.subr.mxu0 0.0
    %726 = vmatpush1.msra.mxu0 0.0
    %727 = vmatprep.subr.mxu0 0.0
    %728 = vmatpush1.msra.mxu0 0.0
    %729 = vmatprep.subr.mxu0 0.0
    %730 = vmatpush1.msra.mxu0 0.0
    %731 = vmatprep.subr.mxu0 0.0
    %732 = vmatpush1.msra.mxu0 0.0
    %733 = vmatprep.subr.mxu0 0.0
    %734 = vmatpush1.msra.mxu0 0.0
    %735 = vmatprep.subr.mxu0 0.0
    %736 = vmatpush1.msra.mxu0 0.0
    %737 = vmatprep.subr.mxu0 0.0
    %738 = vmatpush1.msra.mxu0 0.0
    %739 = vmatprep.subr.mxu0 0.0
    %740 = vmatpush1.msra.mxu0 0.0
    %741 = vmatprep.subr.mxu0 0.0
    %742 = vmatpush1.msra.mxu0 0.0
    %743 = vmatprep.subr.mxu0 0.0
    %744 = vmatpush1.msra.mxu0 0.0
    %745 = vmatprep.subr.mxu0 0.0
    %746 = vmatpush1.msra.mxu0 0.0
    %747 = vmatprep.subr.mxu0 0.0
    %748 = vmatpush1.msra.mxu0 0.0
    %749 = vmatprep.subr.mxu0 0.0
    %750 = vmatpush1.msra.mxu0 0.0
    %751 = vmatprep.subr.mxu0 0.0
    %752 = vmatpush1.msra.mxu0 0.0
    %753 = vmatprep.subr.mxu0 0.0
    %754 = vmatpush1.msra.mxu0 0.0
    %755 = vmatprep.subr.mxu0 0.0
    %756 = vmatpush1.msra.mxu0 0.0
    %757 = vmatprep.subr.mxu0 0.0
    %758 = vmatpush1.msra.mxu0 0.0
    %759 = vmatprep.subr.mxu0 0.0
    %760 = vmatpush1.msra.mxu0 0.0
    %761 = vmatprep.subr.mxu0 0.0
    %762 = vmatpush1.msra.mxu0 0.0
    %763 = vmatprep.subr.mxu0 0.0
    %764 = vmatpush1.msra.mxu0 0.0
    %765 = vmatprep.mubr.f32.mxu0 0.0
    %766 = vmatmul.mubr.f32.gmra.mrb[0].mxu0 %v699
    %v767 = vpop.f32.mrb[0].mxu0
    %v768 = vadd.f32 0.0, %v767
    %v769 = vpop.f32.mrb[0].mxu0
    %770 = vdwg.mxu0
    %771 = vrot.lane.b32.xlu0 %v153, 104
    %v772 = vpop.permute.xlu0 %771
    %773 = vrot.lane.b32.xlu0 %v162, 72
    %v774 = vpop.permute.xlu0 %773
    %v775 = vsel %vm280, %v772, 0
    %v777 = vsel %vm280, %v774, 0
    %779 = vmatprep.subr.mxu0 0.0
    %780 = vmatpush1.xpose.msra.mxu0 %v777
    %781 = vmatprep.subr.mxu0 0.0
    %782 = vmatpush1.xpose.msra.mxu0 0.0
    %783 = vmatprep.subr.mxu0 0.0
    %784 = vmatpush1.xpose.msra.mxu0 0.0
    %785 = vmatprep.subr.mxu0 0.0
    %786 = vmatpush1.xpose.msra.mxu0 0.0
    %787 = vmatprep.subr.mxu0 0.0
    %788 = vmatpush1.xpose.msra.mxu0 0.0
    %789 = vmatprep.subr.mxu0 0.0
    %790 = vmatpush1.xpose.msra.mxu0 0.0
    %791 = vmatprep.subr.mxu0 0.0
    %792 = vmatpush1.xpose.msra.mxu0 0.0
    %793 = vmatprep.subr.mxu0 0.0
    %794 = vmatpush1.xpose.msra.mxu0 0.0
    %795 = vmatprep.subr.mxu0 0.0
    %796 = vmatpush1.xpose.msra.mxu0 0.0
    %797 = vmatprep.subr.mxu0 0.0
    %798 = vmatpush1.xpose.msra.mxu0 0.0
    %799 = vmatprep.subr.mxu0 0.0
    %800 = vmatpush1.xpose.msra.mxu0 0.0
    %801 = vmatprep.subr.mxu0 0.0
    %802 = vmatpush1.xpose.msra.mxu0 0.0
    %803 = vmatprep.subr.mxu0 0.0
    %804 = vmatpush1.xpose.msra.mxu0 0.0
    %805 = vmatprep.subr.mxu0 0.0
    %806 = vmatpush1.xpose.msra.mxu0 0.0
    %807 = vmatprep.subr.mxu0 0.0
    %808 = vmatpush1.xpose.msra.mxu0 0.0
    %809 = vmatprep.subr.mxu0 0.0
    %810 = vmatpush1.xpose.msra.mxu0 0.0
    %811 = vmatprep.subr.mxu0 0.0
    %812 = vmatpush1.xpose.msra.mxu0 0.0
    %813 = vmatprep.subr.mxu0 0.0
    %814 = vmatpush1.xpose.msra.mxu0 0.0
    %815 = vmatprep.subr.mxu0 0.0
    %816 = vmatpush1.xpose.msra.mxu0 0.0
    %817 = vmatprep.subr.mxu0 0.0
    %818 = vmatpush1.xpose.msra.mxu0 0.0
    %819 = vmatprep.subr.mxu0 0.0
    %820 = vmatpush1.xpose.msra.mxu0 0.0
    %821 = vmatprep.subr.mxu0 0.0
    %822 = vmatpush1.xpose.msra.mxu0 0.0
    %823 = vmatprep.subr.mxu0 0.0
    %824 = vmatpush1.xpose.msra.mxu0 0.0
    %825 = vmatprep.subr.mxu0 0.0
    %826 = vmatpush1.xpose.msra.mxu0 0.0
    %827 = vmatprep.subr.mxu0 0.0
    %828 = vmatpush1.xpose.msra.mxu0 0.0
    %829 = vmatprep.subr.mxu0 0.0
    %830 = vmatpush1.xpose.msra.mxu0 0.0
    %831 = vmatprep.subr.mxu0 0.0
    %832 = vmatpush1.xpose.msra.mxu0 0.0
    %833 = vmatprep.subr.mxu0 0.0
    %834 = vmatpush1.xpose.msra.mxu0 0.0
    %835 = vmatprep.subr.mxu0 0.0
    %836 = vmatpush1.xpose.msra.mxu0 0.0
    %837 = vmatprep.subr.mxu0 0.0
    %838 = vmatpush1.xpose.msra.mxu0 0.0
    %839 = vmatprep.subr.mxu0 0.0
    %840 = vmatpush1.xpose.msra.mxu0 0.0
    %841 = vmatprep.subr.mxu0 0.0
    %842 = vmatpush1.xpose.msra.mxu0 0.0
    %843 = vmatprep.mubr.f32.mxu0 0.0
    %844 = vmatmul.mubr.f32.gmra.mrb[0].mxu0 %v775
    %v845 = vpop.f32.mrb[0].mxu0
    %v846 = vadd.f32 0.0, %v845
    %v847 = vpop.f32.mrb[0].mxu0
    %848 = vdwg.mxu0
    %v849 = vsel %vm280, %v846, -inf
    %850 = vmax.xlane.f32.xlu0 %v849
    %v851 = vpop.xlane.xlu0 %850
    %v852 = vsub.f32 %v846, %v851
    %v853 = vmul.f32 %v852, 1.442695
    %v854 = vpow.pop %v853
    %v855 = vsel %vm280, %v854, 0.0
    %856 = vadd.xlane.f32.xlu0 %v855
    %v857 = vpop.xlane.xlu0 %856
    %v858 = vrcp.pop %v857
    %v859 = vmul.f32 %v854, %v858
    %860 = vrot.lane.b32.xlu0 %v274, 104
    %v861 = vpop.permute.xlu0 %860
    %v864 = vsel %vm280, %v859, 0
    %866 = vmatprep.subr.mxu0 0.0
    %867 = vmatpush1.msra.mxu0 %v861
    %868 = vmatprep.subr.mxu0 0.0
    %869 = vmatpush1.msra.mxu0 0.0
    %870 = vmatprep.subr.mxu0 0.0
    %871 = vmatpush1.msra.mxu0 0.0
    %872 = vmatprep.subr.mxu0 0.0
    %873 = vmatpush1.msra.mxu0 0.0
    %874 = vmatprep.subr.mxu0 0.0
    %875 = vmatpush1.msra.mxu0 0.0
    %876 = vmatprep.subr.mxu0 0.0
    %877 = vmatpush1.msra.mxu0 0.0
    %878 = vmatprep.subr.mxu0 0.0
    %879 = vmatpush1.msra.mxu0 0.0
    %880 = vmatprep.subr.mxu0 0.0
    %881 = vmatpush1.msra.mxu0 0.0
    %882 = vmatprep.subr.mxu0 0.0
    %883 = vmatpush1.msra.mxu0 0.0
    %884 = vmatprep.subr.mxu0 0.0
    %885 = vmatpush1.msra.mxu0 0.0
    %886 = vmatprep.subr.mxu0 0.0
    %887 = vmatpush1.msra.mxu0 0.0
    %888 = vmatprep.subr.mxu0 0.0
    %889 = vmatpush1.msra.mxu0 0.0
    %890 = vmatprep.subr.mxu0 0.0
    %891 = vmatpush1.msra.mxu0 0.0
    %892 = vmatprep.subr.mxu0 0.0
    %893 = vmatpush1.msra.mxu0 0.0
    %894 = vmatprep.subr.mxu0 0.0
    %895 = vmatpush1.msra.mxu0 0.0
    %896 = vmatprep.subr.mxu0 0.0
    %897 = vmatpush1.msra.mxu0 0.0
    %898 = vmatprep.subr.mxu0 0.0
    %899 = vmatpush1.msra.mxu0 0.0
    %900 = vmatprep.subr.mxu0 0.0
    %901 = vmatpush1.msra.mxu0 0.0
    %902 = vmatprep.subr.mxu0 0.0
    %903 = vmatpush1.msra.mxu0 0.0
    %904 = vmatprep.subr.mxu0 0.0
    %905 = vmatpush1.msra.mxu0 0.0
    %906 = vmatprep.subr.mxu0 0.0
    %907 = vmatpush1.msra.mxu0 0.0
    %908 = vmatprep.subr.mxu0 0.0
    %909 = vmatpush1.msra.mxu0 0.0
    %910 = vmatprep.subr.mxu0 0.0
    %911 = vmatpush1.msra.mxu0 0.0
    %912 = vmatprep.subr.mxu0 0.0
    %913 = vmatpush1.msra.mxu0 0.0
    %914 = vmatprep.subr.mxu0 0.0
    %915 = vmatpush1.msra.mxu0 0.0
    %916 = vmatprep.subr.mxu0 0.0
    %917 = vmatpush1.msra.mxu0 0.0
    %918 = vmatprep.subr.mxu0 0.0
    %919 = vmatpush1.msra.mxu0 0.0
    %920 = vmatprep.subr.mxu0 0.0
    %921 = vmatpush1.msra.mxu0 0.0
    %922 = vmatprep.subr.mxu0 0.0
    %923 = vmatpush1.msra.mxu0 0.0
    %924 = vmatprep.subr.mxu0 0.0
    %925 = vmatpush1.msra.mxu0 0.0
    %926 = vmatprep.subr.mxu0 0.0
    %927 = vmatpush1.msra.mxu0 0.0
    %928 = vmatprep.subr.mxu0 0.0
    %929 = vmatpush1.msra.mxu0 0.0
    %930 = vmatprep.mubr.f32.mxu0 0.0
    %931 = vmatmul.mubr.f32.gmra.mrb[0].mxu0 %v864
    %v932 = vpop.f32.mrb[0].mxu0
    %v933 = vadd.f32 0.0, %v932
    %v934 = vpop.f32.mrb[0].mxu0
    %935 = vdwg.mxu0
    %937 = vrot.lane.b32.xlu0 %v603, 8
    %v938 = vpop.permute.xlu0 %937
    %941 = vrot.lane.b32.xlu0 %v768, 16
    %v942 = vpop.permute.xlu0 %941
    %945 = vrot.lane.b32.xlu0 %v933, 24
    %v946 = vpop.permute.xlu0 %945
    %v948 = vsel %vm280, %v437, %v938
    %vm949 = vcmask 130048
    %v950 = vsel %vm949, %v948, %v942
    %vm951 = vcmask 195584
    %v952 = vsel %vm951, %v950, %v946
    %v953 = vlaneseq
    %v954 = vshrl.u32 %v953, 7
    %v955 = vsub.s32 3, %v954
    %v956 = vrot.slane %v22, %v955
    %957 = vrot.lane.b32.xlu0 %v18, 32
    %v958 = vpop.permute.xlu0 %957
    %959 = vrot.lane.b32.xlu0 %v19, 32
    %v960 = vpop.permute.xlu0 %959
    %961 = vrot.lane.b32.xlu0 %v20, 32
    %v962 = vpop.permute.xlu0 %961
    %963 = vrot.lane.b32.xlu0 %v21, 32
    %v964 = vpop.permute.xlu0 %963
    %v970 = vsel %vm76, %v952, 0
    %972 = vmatprep.subr.mxu0 0.0
    %973 = vmatpush1.msra.mxu0 %v958
    %974 = vmatprep.subr.mxu0 0.0
    %975 = vmatpush1.msra.mxu0 %v960
    %976 = vmatprep.subr.mxu0 0.0
    %977 = vmatpush1.msra.mxu0 %v962
    %978 = vmatprep.subr.mxu0 0.0
    %979 = vmatpush1.msra.mxu0 %v964
    %980 = vmatprep.subr.mxu0 0.0
    %981 = vmatpush1.msra.mxu0 0.0
    %982 = vmatprep.subr.mxu0 0.0
    %983 = vmatpush1.msra.mxu0 0.0
    %984 = vmatprep.subr.mxu0 0.0
    %985 = vmatpush1.msra.mxu0 0.0
    %986 = vmatprep.subr.mxu0 0.0
    %987 = vmatpush1.msra.mxu0 0.0
    %988 = vmatprep.subr.mxu0 0.0
    %989 = vmatpush1.msra.mxu0 0.0
    %990 = vmatprep.subr.mxu0 0.0
    %991 = vmatpush1.msra.mxu0 0.0
    %992 = vmatprep.subr.mxu0 0.0
    %993 = vmatpush1.msra.mxu0 0.0
    %994 = vmatprep.subr.mxu0 0.0
    %995 = vmatpush1.msra.mxu0 0.0
    %996 = vmatprep.subr.mxu0 0.0
    %997 = vmatpush1.msra.mxu0 0.0
    %998 = vmatprep.subr.mxu0 0.0
    %999 = vmatpush1.msra.mxu0 0.0
    %1000 = vmatprep.subr.mxu0 0.0
    %1001 = vmatpush1.msra.mxu0 0.0
    %1002 = vmatprep.subr.mxu0 0.0
    %1003 = vmatpush1.msra.mxu0 0.0
    %1004 = vmatprep.subr.mxu0 0.0
    %1005 = vmatpush1.msra.mxu0 0.0
    %1006 = vmatprep.subr.mxu0 0.0
    %1007 = vmatpush1.msra.mxu0 0.0
    %1008 = vmatprep.subr.mxu0 0.0
    %1009 = vmatpush1.msra.mxu0 0.0
    %1010 = vmatprep.subr.mxu0 0.0
    %1011 = vmatpush1.msra.mxu0 0.0
    %1012 = vmatprep.subr.mxu0 0.0
    %1013 = vmatpush1.msra.mxu0 0.0
    %1014 = vmatprep.subr.mxu0 0.0
    %1015 = vmatpush1.msra.mxu0 0.0
    %1016 = vmatprep.subr.mxu0 0.0
    %1017 = vmatpush1.msra.mxu0 0.0
    %1018 = vmatprep.subr.mxu0 0.0
    %1019 = vmatpush1.msra.mxu0 0.0
    %1020 = vmatprep.subr.mxu0 0.0
    %1021 = vmatpush1.msra.mxu0 0.0
    %1022 = vmatprep.subr.mxu0 0.0
    %1023 = vmatpush1.msra.mxu0 0.0
    %1024 = vmatprep.subr.mxu0 0.0
    %1025 = vmatpush1.msra.mxu0 0.0
    %1026 = vmatprep.subr.mxu0 0.0
    %1027 = vmatpush1.msra.mxu0 0.0
    %1028 = vmatprep.subr.mxu0 0.0
    %1029 = vmatpush1.msra.mxu0 0.0
    %1030 = vmatprep.subr.mxu0 0.0
    %1031 = vmatpush1.msra.mxu0 0.0
    %1032 = vmatprep.subr.mxu0 0.0
    %1033 = vmatpush1.msra.mxu0 0.0
    %1034 = vmatprep.subr.mxu0 0.0
    %1035 = vmatpush1.msra.mxu0 0.0
    %1036 = vmatprep.mubr.f32.mxu0 0.0
    %1037 = vmatmul.mubr.f32.gmra.mrb[0].mxu0 %v970
    %v1038 = vpop.f32.mrb[0].mxu0
    %v1039 = vadd.f32 %v956, %v1038
    %v1040 = vpop.f32.mrb[0].mxu0
    %1041 = vdwg.mxu0
    %v1043 = vrot.slane %v1039, 1
    %v1044 = vrot.slane %v1039, 2
    %v1045 = vrot.slane %v1039, 3
    %v1046 = vrot.slane %v1039, 4
    %v1047 = vrot.slane %v1039, 5
    %v1048 = vrot.slane %v1039, 6
    %v1049 = vrot.slane %v1039, 7
    %v1058 = vadd.f32 %v23, %v1039
    %v1059 = vadd.f32 %v24, %v1043
    %v1060 = vadd.f32 %v25, %v1044
    %v1061 = vadd.f32 %v26, %v1045
    %v1062 = vadd.f32 %v27, %v1046
    %v1063 = vadd.f32 %v28, %v1047
    %v1064 = vadd.f32 %v29, %v1048
    %v1065 = vadd.f32 %v30, %v1049
    %v1074 = vrot.slane %v1059, 7
    %v1075 = vsel %vm56, %v1074, %v1058
    %v1076 = vrot.slane %v1060, 6
    %v1077 = vsel %vm59, %v1076, %v1075
    %v1078 = vrot.slane %v1061, 5
    %v1079 = vsel %vm62, %v1078, %v1077
    %v1080 = vrot.slane %v1062, 4
    %v1081 = vsel %vm65, %v1080, %v1079
    %v1082 = vrot.slane %v1063, 3
    %v1083 = vsel %vm68, %v1082, %v1081
    %v1084 = vrot.slane %v1064, 2
    %v1085 = vsel %vm71, %v1084, %v1083
    %v1086 = vrot.slane %v1065, 1
    %v1087 = vsel %vm74, %v1086, %v1085
    %v1089 = vsel %vm76, %v1087, 0.0
    %1090 = vadd.xlane.f32.xlu0 %v1089
    %v1091 = vpop.xlane.xlu0 %1090
    %v1092 = vrcp.pop 32.0
    %v1093 = vmul.f32 %v1091, %v1092
    %v1095 = vrot.slane %v1093, 1
    %v1096 = vrot.slane %v1093, 2
    %v1097 = vrot.slane %v1093, 3
    %v1098 = vrot.slane %v1093, 4
    %v1099 = vrot.slane %v1093, 5
    %v1100 = vrot.slane %v1093, 6
    %v1101 = vrot.slane %v1093, 7
    %v1110 = vsub.f32 %v1058, %v1093
    %v1111 = vsub.f32 %v1059, %v1095
    %v1112 = vsub.f32 %v1060, %v1096
    %v1113 = vsub.f32 %v1061, %v1097
    %v1114 = vsub.f32 %v1062, %v1098
    %v1115 = vsub.f32 %v1063, %v1099
    %v1116 = vsub.f32 %v1064, %v1100
    %v1117 = vsub.f32 %v1065, %v1101
    %v1118 = vmul.f32 %v1110, %v1110
    %v1119 = vmul.f32 %v1111, %v1111
    %v1120 = vmul.f32 %v1112, %v1112
    %v1121 = vmul.f32 %v1113, %v1113
    %v1122 = vmul.f32 %v1114, %v1114
    %v1123 = vmul.f32 %v1115, %v1115
    %v1124 = vmul.f32 %v1116, %v1116
    %v1125 = vmul.f32 %v1117, %v1117
    %v1134 = vrot.slane %v1119, 7
    %v1135 = vsel %vm56, %v1134, %v1118
    %v1136 = vrot.slane %v1120, 6
    %v1137 = vsel %vm59, %v1136, %v1135
    %v1138 = vrot.slane %v1121, 5
    %v1139 = vsel %vm62, %v1138, %v1137
    %v1140 = vrot.slane %v1122, 4
    %v1141 = vsel %vm65, %v1140, %v1139
    %v1142 = vrot.slane %v1123, 3
    %v1143 = vsel %vm68, %v1142, %v1141
    %v1144 = vrot.slane %v1124, 2
    %v1145 = vsel %vm71, %v1144, %v1143
    %v1146 = vrot.slane %v1125, 1
    %v1147 = vsel %vm74, %v1146, %v1145
    %v1149 = vsel %vm76, %v1147, 0.0
    %1150 = vadd.xlane.f32.xlu0 %v1149
    %v1151 = vpop.xlane.xlu0 %1150
    %v1152 = vmul.f32 %v1151, %v1092
    %v1153 = vadd.f32 %v1152, 1e-05
    %v1154 = vrsqrt.pop %v1153
    %v1156 = vrot.slane %v1154, 1
    %v1157 = vrot.slane %v1154, 2
    %v1158 = vrot.slane %v1154, 3
    %v1159 = vrot.slane %v1154, 4
    %v1160 = vrot.slane %v1154, 5
    %v1161 = vrot.slane %v1154, 6
    %v1162 = vrot.slane %v1154, 7
    %v1171 = vmul.f32 %v1110, %v1154
    %v1172 = vmul.f32 %v1111, %v1156
    %v1173 = vmul.f32 %v1112, %v1157
    %v1174 = vmul.f32 %v1113, %v1158
    %v1175 = vmul.f32 %v1114, %v1159
    %v1176 = vmul.f32 %v1115, %v1160
    %v1177 = vmul.f32 %v1116, %v1161
    %v1178 = vmul.f32 %v1117, %v1162
    %v1179 = vlaneseq
    %v1180 = vshrl.u32 %v1179, 7
    %v1181 = vsub.s32 4, %v1180
    %v1182 = vrot.slane %v22, %v1181
    %v1183 = vmul.f32 %v1171, %v1182
    %v1184 = vmul.f32 %v1172, %v1182
    %v1185 = vmul.f32 %v1173, %v1182
    %v1186 = vmul.f32 %v1174, %v1182
    %v1187 = vmul.f32 %v1175, %v1182
    %v1188 = vmul.f32 %v1176, %v1182
    %v1189 = vmul.f32 %v1177, %v1182
    %v1190 = vmul.f32 %v1178, %v1182
    %v1191 = vlaneseq
    %v1192 = vshrl.u32 %v1191, 7
    %v1193 = vsub.s32 5, %v1192
    %v1194 = vrot.slane %v22, %v1193
    %v1195 = vadd.f32 %v1183, %v1194
    %v1196 = vadd.f32 %v1184, %v1194
    %v1197 = vadd.f32 %v1185, %v1194
    %v1198 = vadd.f32 %v1186, %v1194
    %v1199 = vadd.f32 %v1187, %v1194
    %v1200 = vadd.f32 %v1188, %v1194
    %v1201 = vadd.f32 %v1189, %v1194
    %v1202 = vadd.f32 %v1190, %v1194
    %vm1203 = vcmask 253952
    %1204 = vst.msk [vmem:[#allocation2] sm:$0x1] %vm1203, %v1195
    %1205 = vst.msk [vmem:[#allocation2 + $0x2] sm:$0x1] %vm1203, %v1196
    %1206 = vst.msk [vmem:[#allocation2 + $0x4] sm:$0x1] %vm1203, %v1197
    %1207 = vst.msk [vmem:[#allocation2 + $0x6] sm:$0x1] %vm1203, %v1198
    %1208 = vst.msk [vmem:[#allocation2 + $0x8] sm:$0x1] %vm1203, %v1199
    %1209 = vst.msk [vmem:[#allocation2 + $0xa] sm:$0x1] %vm1203, %v1200
    %1210 = vst.msk [vmem:[#allocation2 + $0xc] sm:$0x1] %vm1203, %v1201
    %1211 = vst.msk [vmem:[#allocation2 + $0xe] sm:$0x1] %vm1203, %v1202
    %v1212 = vld [vmem:[%s0 + $0x1] sm:$0x1]
    %v1213 = vld [vmem:[%s0 + $0x3] sm:$0x1]
    %v1214 = vld [vmem:[%s0 + $0x5] sm:$0x1]
    %v1215 = vld [vmem:[%s0 + $0x7] sm:$0x1]
    %v1216 = vld [vmem:[%s0 + $0x9] sm:$0x1]
    %v1217 = vld [vmem:[%s0 + $0xb] sm:$0x1]
    %v1218 = vld [vmem:[%s0 + $0xd] sm:$0x1]
    %v1219 = vld [vmem:[%s0 + $0xf] sm:$0x1]
    %v1220 = vld [vmem:[%s1 + $0x1] sm:$0x1]
    %v1221 = vld [vmem:[%s1 + $0x3] sm:$0x1]
    %v1222 = vld [vmem:[%s1 + $0x5] sm:$0x1]
    %v1223 = vld [vmem:[%s1 + $0x7] sm:$0x1]
    %v1224 = vld [vmem:[%s1 + $0x9] sm:$0x1]
    %v1225 = vld [vmem:[%s1 + $0xb] sm:$0x1]
    %v1226 = vld [vmem:[%s1 + $0xd] sm:$0x1]
    %v1227 = vld [vmem:[%s1 + $0xf] sm:$0x1]
    %v1228 = vadd.f32 %v1212, %v1220
    %v1229 = vadd.f32 %v1213, %v1221
    %v1230 = vadd.f32 %v1214, %v1222
    %v1231 = vadd.f32 %v1215, %v1223
    %v1232 = vadd.f32 %v1216, %v1224
    %v1233 = vadd.f32 %v1217, %v1225
    %v1234 = vadd.f32 %v1218, %v1226
    %v1235 = vadd.f32 %v1219, %v1227
    %v1244 = vrot.slane %v1229, 7
    %v1245 = vsel %vm56, %v1244, %v1228
    %v1246 = vrot.slane %v1230, 6
    %v1247 = vsel %vm59, %v1246, %v1245
    %v1248 = vrot.slane %v1231, 5
    %v1249 = vsel %vm62, %v1248, %v1247
    %v1250 = vrot.slane %v1232, 4
    %v1251 = vsel %vm65, %v1250, %v1249
    %v1252 = vrot.slane %v1233, 3
    %v1253 = vsel %vm68, %v1252, %v1251
    %v1254 = vrot.slane %v1234, 2
    %v1255 = vsel %vm71, %v1254, %v1253
    %v1256 = vrot.slane %v1235, 1
    %v1257 = vsel %vm74, %v1256, %v1255
    %v1258 = vsel %vm76, %v1257, 0
    %1260 = vmatprep.subr.mxu0 0.0
    %1261 = vmatpush1.msra.mxu0 %v18
    %1262 = vmatprep.subr.mxu0 0.0
    %1263 = vmatpush1.msra.mxu0 %v19
    %1264 = vmatprep.subr.mxu0 0.0
    %1265 = vmatpush1.msra.mxu0 %v20
    %1266 = vmatprep.subr.mxu0 0.0
    %1267 = vmatpush1.msra.mxu0 %v21
    %1268 = vmatprep.subr.mxu0 0.0
    %1269 = vmatpush1.msra.mxu0 0.0
    %1270 = vmatprep.subr.mxu0 0.0
    %1271 = vmatpush1.msra.mxu0 0.0
    %1272 = vmatprep.subr.mxu0 0.0
    %1273 = vmatpush1.msra.mxu0 0.0
    %1274 = vmatprep.subr.mxu0 0.0
    %1275 = vmatpush1.msra.mxu0 0.0
    %1276 = vmatprep.subr.mxu0 0.0
    %1277 = vmatpush1.msra.mxu0 0.0
    %1278 = vmatprep.subr.mxu0 0.0
    %1279 = vmatpush1.msra.mxu0 0.0
    %1280 = vmatprep.subr.mxu0 0.0
    %1281 = vmatpush1.msra.mxu0 0.0
    %1282 = vmatprep.subr.mxu0 0.0
    %1283 = vmatpush1.msra.mxu0 0.0
    %1284 = vmatprep.subr.mxu0 0.0
    %1285 = vmatpush1.msra.mxu0 0.0
    %1286 = vmatprep.subr.mxu0 0.0
    %1287 = vmatpush1.msra.mxu0 0.0
    %1288 = vmatprep.subr.mxu0 0.0
    %1289 = vmatpush1.msra.mxu0 0.0
    %1290 = vmatprep.subr.mxu0 0.0
    %1291 = vmatpush1.msra.mxu0 0.0
    %1292 = vmatprep.subr.mxu0 0.0
    %1293 = vmatpush1.msra.mxu0 0.0
    %1294 = vmatprep.subr.mxu0 0.0
    %1295 = vmatpush1.msra.mxu0 0.0
    %1296 = vmatprep.subr.mxu0 0.0
    %1297 = vmatpush1.msra.mxu0 0.0
    %1298 = vmatprep.subr.mxu0 0.0
    %1299 = vmatpush1.msra.mxu0 0.0
    %1300 = vmatprep.subr.mxu0 0.0
    %1301 = vmatpush1.msra.mxu0 0.0
    %1302 = vmatprep.subr.mxu0 0.0
    %1303 = vmatpush1.msra.mxu0 0.0
    %1304 = vmatprep.subr.mxu0 0.0
    %1305 = vmatpush1.msra.mxu0 0.0
    %1306 = vmatprep.subr.mxu0 0.0
    %1307 = vmatpush1.msra.mxu0 0.0
    %1308 = vmatprep.subr.mxu0 0.0
    %1309 = vmatpush1.msra.mxu0 0.0
    %1310 = vmatprep.subr.mxu0 0.0
    %1311 = vmatpush1.msra.mxu0 0.0
    %1312 = vmatprep.subr.mxu0 0.0
    %1313 = vmatpush1.msra.mxu0 0.0
    %1314 = vmatprep.subr.mxu0 0.0
    %1315 = vmatpush1.msra.mxu0 0.0
    %1316 = vmatprep.subr.mxu0 0.0
    %1317 = vmatpush1.msra.mxu0 0.0
    %1318 = vmatprep.subr.mxu0 0.0
    %1319 = vmatpush1.msra.mxu0 0.0
    %1320 = vmatprep.subr.mxu0 0.0
    %1321 = vmatpush1.msra.mxu0 0.0
    %1322 = vmatprep.subr.mxu0 0.0
    %1323 = vmatpush1.msra.mxu0 0.0
    %1324 = vmatprep.mubr.f32.mxu0 0.0
    %1325 = vmatmul.mubr.f32.gmra.mrb[0].mxu0 %v1258
    %v1326 = vpop.f32.mrb[0].mxu0
    %v1327 = vadd.f32 0.0, %v1326
    %v1328 = vpop.f32.mrb[0].mxu0
    %1329 = vdwg.mxu0
    %v1330 = vadd.f32 %v1327, %v152
    %v1331 = vadd.f32 %v1327, %v160
    %v1340 = vrot.slane %v1213, 7
    %v1341 = vsel %vm56, %v1340, %v1212
    %v1342 = vrot.slane %v1214, 6
    %v1343 = vsel %vm59, %v1342, %v1341
    %v1344 = vrot.slane %v1215, 5
    %v1345 = vsel %vm62, %v1344, %v1343
    %v1346 = vrot.slane %v1216, 4
    %v1347 = vsel %vm65, %v1346, %v1345
    %v1348 = vrot.slane %v1217, 3
    %v1349 = vsel %vm68, %v1348, %v1347
    %v1350 = vrot.slane %v1218, 2
    %v1351 = vsel %vm71, %v1350, %v1349
    %v1352 = vrot.slane %v1219, 1
    %v1353 = vsel %vm74, %v1352, %v1351
    %v1354 = vsel %vm76, %v1353, 0
    %1356 = vmatprep.subr.mxu0 0.0
    %1357 = vmatpush1.msra.mxu0 %v194
    %1358 = vmatprep.subr.mxu0 0.0
    %1359 = vmatpush1.msra.mxu0 %v196
    %1360 = vmatprep.subr.mxu0 0.0
    %1361 = vmatpush1.msra.mxu0 %v198
    %1362 = vmatprep.subr.mxu0 0.0
    %1363 = vmatpush1.msra.mxu0 %v200
    %1364 = vmatprep.subr.mxu0 0.0
    %1365 = vmatpush1.msra.mxu0 0.0
    %1366 = vmatprep.subr.mxu0 0.0
    %1367 = vmatpush1.msra.mxu0 0.0
    %1368 = vmatprep.subr.mxu0 0.0
    %1369 = vmatpush1.msra.mxu0 0.0
    %1370 = vmatprep.subr.mxu0 0.0
    %1371 = vmatpush1.msra.mxu0 0.0
    %1372 = vmatprep.subr.mxu0 0.0
    %1373 = vmatpush1.msra.mxu0 0.0
    %1374 = vmatprep.subr.mxu0 0.0
    %1375 = vmatpush1.msra.mxu0 0.0
    %1376 = vmatprep.subr.mxu0 0.0
    %1377 = vmatpush1.msra.mxu0 0.0
    %1378 = vmatprep.subr.mxu0 0.0
    %1379 = vmatpush1.msra.mxu0 0.0
    %1380 = vmatprep.subr.mxu0 0.0
    %1381 = vmatpush1.msra.mxu0 0.0
    %1382 = vmatprep.subr.mxu0 0.0
    %1383 = vmatpush1.msra.mxu0 0.0
    %1384 = vmatprep.subr.mxu0 0.0
    %1385 = vmatpush1.msra.mxu0 0.0
    %1386 = vmatprep.subr.mxu0 0.0
    %1387 = vmatpush1.msra.mxu0 0.0
    %1388 = vmatprep.subr.mxu0 0.0
    %1389 = vmatpush1.msra.mxu0 0.0
    %1390 = vmatprep.subr.mxu0 0.0
    %1391 = vmatpush1.msra.mxu0 0.0
    %1392 = vmatprep.subr.mxu0 0.0
    %1393 = vmatpush1.msra.mxu0 0.0
    %1394 = vmatprep.subr.mxu0 0.0
    %1395 = vmatpush1.msra.mxu0 0.0
    %1396 = vmatprep.subr.mxu0 0.0
    %1397 = vmatpush1.msra.mxu0 0.0
    %1398 = vmatprep.subr.mxu0 0.0
    %1399 = vmatpush1.msra.mxu0 0.0
    %1400 = vmatprep.subr.mxu0 0.0
    %1401 = vmatpush1.msra.mxu0 0.0
    %1402 = vmatprep.subr.mxu0 0.0
    %1403 = vmatpush1.msra.mxu0 0.0
    %1404 = vmatprep.subr.mxu0 0.0
    %1405 = vmatpush1.msra.mxu0 0.0
    %1406 = vmatprep.subr.mxu0 0.0
    %1407 = vmatpush1.msra.mxu0 0.0
    %1408 = vmatprep.subr.mxu0 0.0
    %1409 = vmatpush1.msra.mxu0 0.0
    %1410 = vmatprep.subr.mxu0 0.0
    %1411 = vmatpush1.msra.mxu0 0.0
    %1412 = vmatprep.subr.mxu0 0.0
    %1413 = vmatpush1.msra.mxu0 0.0
    %1414 = vmatprep.subr.mxu0 0.0
    %1415 = vmatpush1.msra.mxu0 0.0
    %1416 = vmatprep.subr.mxu0 0.0
    %1417 = vmatpush1.msra.mxu0 0.0
    %1418 = vmatprep.subr.mxu0 0.0
    %1419 = vmatpush1.msra.mxu0 0.0
    %1420 = vmatprep.mubr.f32.mxu0 0.0
    %1421 = vmatmul.mubr.f32.gmra.mrb[0].mxu0 %v1354
    %v1422 = vpop.f32.mrb[0].mxu0
    %v1423 = vadd.f32 %v166, %v1422
    %v1424 = vpop.f32.mrb[0].mxu0
    %1425 = vdwg.mxu0
    %1427 = vrot.lane.b32.xlu0 %v1331, 96
    %v1428 = vpop.permute.xlu0 %1427
    %v1430 = vsel %vm280, %v1330, 0
    %v1432 = vsel %vm280, %v1428, 0
    %1434 = vmatprep.subr.mxu0 0.0
    %1435 = vmatpush1.xpose.msra.mxu0 %v1432
    %1436 = vmatprep.subr.mxu0 0.0
    %1437 = vmatpush1.xpose.msra.mxu0 0.0
    %1438 = vmatprep.subr.mxu0 0.0
    %1439 = vmatpush1.xpose.msra.mxu0 0.0
    %1440 = vmatprep.subr.mxu0 0.0
    %1441 = vmatpush1.xpose.msra.mxu0 0.0
    %1442 = vmatprep.subr.mxu0 0.0
    %1443 = vmatpush1.xpose.msra.mxu0 0.0
    %1444 = vmatprep.subr.mxu0 0.0
    %1445 = vmatpush1.xpose.msra.mxu0 0.0
    %1446 = vmatprep.subr.mxu0 0.0
    %1447 = vmatpush1.xpose.msra.mxu0 0.0
    %1448 = vmatprep.subr.mxu0 0.0
    %1449 = vmatpush1.xpose.msra.mxu0 0.0
    %1450 = vmatprep.subr.mxu0 0.0
    %1451 = vmatpush1.xpose.msra.mxu0 0.0
    %1452 = vmatprep.subr.mxu0 0.0
    %1453 = vmatpush1.xpose.msra.mxu0 0.0
    %1454 = vmatprep.subr.mxu0 0.0
    %1455 = vmatpush1.xpose.msra.mxu0 0.0
    %1456 = vmatprep.subr.mxu0 0.0
    %1457 = vmatpush1.xpose.msra.mxu0 0.0
    %1458 = vmatprep.subr.mxu0 0.0
    %1459 = vmatpush1.xpose.msra.mxu0 0.0
    %1460 = vmatprep.subr.mxu0 0.0
    %1461 = vmatpush1.xpose.msra.mxu0 0.0
    %1462 = vmatprep.subr.mxu0 0.0
    %1463 = vmatpush1.xpose.msra.mxu0 0.0
    %1464 = vmatprep.subr.mxu0 0.0
    %1465 = vmatpush1.xpose.msra.mxu0 0.0
    %1466 = vmatprep.subr.mxu0 0.0
    %1467 = vmatpush1.xpose.msra.mxu0 0.0
    %1468 = vmatprep.subr.mxu0 0.0
    %1469 = vmatpush1.xpose.msra.mxu0 0.0
    %1470 = vmatprep.subr.mxu0 0.0
    %1471 = vmatpush1.xpose.msra.mxu0 0.0
    %1472 = vmatprep.subr.mxu0 0.0
    %1473 = vmatpush1.xpose.msra.mxu0 0.0
    %1474 = vmatprep.subr.mxu0 0.0
    %1475 = vmatpush1.xpose.msra.mxu0 0.0
    %1476 = vmatprep.subr.mxu0 0.0
    %1477 = vmatpush1.xpose.msra.mxu0 0.0
    %1478 = vmatprep.subr.mxu0 0.0
    %1479 = vmatpush1.xpose.msra.mxu0 0.0
    %1480 = vmatprep.subr.mxu0 0.0
    %1481 = vmatpush1.xpose.msra.mxu0 0.0
    %1482 = vmatprep.subr.mxu0 0.0
    %1483 = vmatpush1.xpose.msra.mxu0 0.0
    %1484 = vmatprep.subr.mxu0 0.0
    %1485 = vmatpush1.xpose.msra.mxu0 0.0
    %1486 = vmatprep.subr.mxu0 0.0
    %1487 = vmatpush1.xpose.msra.mxu0 0.0
    %1488 = vmatprep.subr.mxu0 0.0
    %1489 = vmatpush1.xpose.msra.mxu0 0.0
    %1490 = vmatprep.subr.mxu0 0.0
    %1491 = vmatpush1.xpose.msra.mxu0 0.0
    %1492 = vmatprep.subr.mxu0 0.0
    %1493 = vmatpush1.xpose.msra.mxu0 0.0
    %1494 = vmatprep.subr.mxu0 0.0
    %1495 = vmatpush1.xpose.msra.mxu0 0.0
    %1496 = vmatprep.subr.mxu0 0.0
    %1497 = vmatpush1.xpose.msra.mxu0 0.0
    %1498 = vmatprep.mubr.f32.mxu0 0.0
    %1499 = vmatmul.mubr.f32.gmra.mrb[0].mxu0 %v1430
    %v1500 = vpop.f32.mrb[0].mxu0
    %v1501 = vadd.f32 0.0, %v1500
    %v1502 = vpop.f32.mrb[0].mxu0
    %1503 = vdwg.mxu0
    %v1504 = vsel %vm280, %v1501, -inf
    %1505 = vmax.xlane.f32.xlu0 %v1504
    %v1506 = vpop.xlane.xlu0 %1505
    %v1507 = vsub.f32 %v1501, %v1506
    %v1508 = vmul.f32 %v1507, 1.442695
    %v1509 = vpow.pop %v1508
    %v1510 = vsel %vm280, %v1509, 0.0
    %1511 = vadd.xlane.f32.xlu0 %v1510
    %v1512 = vpop.xlane.xlu0 %1511
    %v1513 = vrcp.pop %v1512
    %v1514 = vmul.f32 %v1509, %v1513
    %v1516 = vsel %vm280, %v1514, 0
    %1518 = vmatprep.subr.mxu0 0.0
    %1519 = vmatpush1.msra.mxu0 %v1423
    %1520 = vmatprep.subr.mxu0 0.0
    %1521 = vmatpush1.msra.mxu0 0.0
    %1522 = vmatprep.subr.mxu0 0.0
    %1523 = vmatpush1.msra.mxu0 0.0
    %1524 = vmatprep.subr.mxu0 0.0
    %1525 = vmatpush1.msra.mxu0 0.0
    %1526 = vmatprep.subr.mxu0 0.0
    %1527 = vmatpush1.msra.mxu0 0.0
    %1528 = vmatprep.subr.mxu0 0.0
    %1529 = vmatpush1.msra.mxu0 0.0
    %1530 = vmatprep.subr.mxu0 0.0
    %1531 = vmatpush1.msra.mxu0 0.0
    %1532 = vmatprep.subr.mxu0 0.0
    %1533 = vmatpush1.msra.mxu0 0.0
    %1534 = vmatprep.subr.mxu0 0.0
    %1535 = vmatpush1.msra.mxu0 0.0
    %1536 = vmatprep.subr.mxu0 0.0
    %1537 = vmatpush1.msra.mxu0 0.0
    %1538 = vmatprep.subr.mxu0 0.0
    %1539 = vmatpush1.msra.mxu0 0.0
    %1540 = vmatprep.subr.mxu0 0.0
    %1541 = vmatpush1.msra.mxu0 0.0
    %1542 = vmatprep.subr.mxu0 0.0
    %1543 = vmatpush1.msra.mxu0 0.0
    %1544 = vmatprep.subr.mxu0 0.0
    %1545 = vmatpush1.msra.mxu0 0.0
    %1546 = vmatprep.subr.mxu0 0.0
    %1547 = vmatpush1.msra.mxu0 0.0
    %1548 = vmatprep.subr.mxu0 0.0
    %1549 = vmatpush1.msra.mxu0 0.0
    %1550 = vmatprep.subr.mxu0 0.0
    %1551 = vmatpush1.msra.mxu0 0.0
    %1552 = vmatprep.subr.mxu0 0.0
    %1553 = vmatpush1.msra.mxu0 0.0
    %1554 = vmatprep.subr.mxu0 0.0
    %1555 = vmatpush1.msra.mxu0 0.0
    %1556 = vmatprep.subr.mxu0 0.0
    %1557 = vmatpush1.msra.mxu0 0.0
    %1558 = vmatprep.subr.mxu0 0.0
    %1559 = vmatpush1.msra.mxu0 0.0
    %1560 = vmatprep.subr.mxu0 0.0
    %1561 = vmatpush1.msra.mxu0 0.0
    %1562 = vmatprep.subr.mxu0 0.0
    %1563 = vmatpush1.msra.mxu0 0.0
    %1564 = vmatprep.subr.mxu0 0.0
    %1565 = vmatpush1.msra.mxu0 0.0
    %1566 = vmatprep.subr.mxu0 0.0
    %1567 = vmatpush1.msra.mxu0 0.0
    %1568 = vmatprep.subr.mxu0 0.0
    %1569 = vmatpush1.msra.mxu0 0.0
    %1570 = vmatprep.subr.mxu0 0.0
    %1571 = vmatpush1.msra.mxu0 0.0
    %1572 = vmatprep.subr.mxu0 0.0
    %1573 = vmatpush1.msra.mxu0 0.0
    %1574 = vmatprep.subr.mxu0 0.0
    %1575 = vmatpush1.msra.mxu0 0.0
    %1576 = vmatprep.subr.mxu0 0.0
    %1577 = vmatpush1.msra.mxu0 0.0
    %1578 = vmatprep.subr.mxu0 0.0
    %1579 = vmatpush1.msra.mxu0 0.0
    %1580 = vmatprep.subr.mxu0 0.0
    %1581 = vmatpush1.msra.mxu0 0.0
    %1582 = vmatprep.mubr.f32.mxu0 0.0
    %1583 = vmatmul.mubr.f32.gmra.mrb[0].mxu0 %v1516
    %v1584 = vpop.f32.mrb[0].mxu0
    %v1585 = vadd.f32 0.0, %v1584
    %v1586 = vpop.f32.mrb[0].mxu0
    %1587 = vdwg.mxu0
    %1588 = vrot.lane.b32.xlu0 %v1330, 120
    %v1589 = vpop.permute.xlu0 %1588
    %1590 = vrot.lane.b32.xlu0 %v1331, 88
    %v1591 = vpop.permute.xlu0 %1590
    %v1592 = vsel %vm280, %v1589, 0
    %v1594 = vsel %vm280, %v1591, 0
    %1596 = vmatprep.subr.mxu0 0.0
    %1597 = vmatpush1.xpose.msra.mxu0 %v1594
    %1598 = vmatprep.subr.mxu0 0.0
    %1599 = vmatpush1.xpose.msra.mxu0 0.0
    %1600 = vmatprep.subr.mxu0 0.0
    %1601 = vmatpush1.xpose.msra.mxu0 0.0
    %1602 = vmatprep.subr.mxu0 0.0
    %1603 = vmatpush1.xpose.msra.mxu0 0.0
    %1604 = vmatprep.subr.mxu0 0.0
    %1605 = vmatpush1.xpose.msra.mxu0 0.0
    %1606 = vmatprep.subr.mxu0 0.0
    %1607 = vmatpush1.xpose.msra.mxu0 0.0
    %1608 = vmatprep.subr.mxu0 0.0
    %1609 = vmatpush1.xpose.msra.mxu0 0.0
    %1610 = vmatprep.subr.mxu0 0.0
    %1611 = vmatpush1.xpose.msra.mxu0 0.0
    %1612 = vmatprep.subr.mxu0 0.0
    %1613 = vmatpush1.xpose.msra.mxu0 0.0
    %1614 = vmatprep.subr.mxu0 0.0
    %1615 = vmatpush1.xpose.msra.mxu0 0.0
    %1616 = vmatprep.subr.mxu0 0.0
    %1617 = vmatpush1.xpose.msra.mxu0 0.0
    %1618 = vmatprep.subr.mxu0 0.0
    %1619 = vmatpush1.xpose.msra.mxu0 0.0
    %1620 = vmatprep.subr.mxu0 0.0
    %1621 = vmatpush1.xpose.msra.mxu0 0.0
    %1622 = vmatprep.subr.mxu0 0.0
    %1623 = vmatpush1.xpose.msra.mxu0 0.0
    %1624 = vmatprep.subr.mxu0 0.0
    %1625 = vmatpush1.xpose.msra.mxu0 0.0
    %1626 = vmatprep.subr.mxu0 0.0
    %1627 = vmatpush1.xpose.msra.mxu0 0.0
    %1628 = vmatprep.subr.mxu0 0.0
    %1629 = vmatpush1.xpose.msra.mxu0 0.0
    %1630 = vmatprep.subr.mxu0 0.0
    %1631 = vmatpush1.xpose.msra.mxu0 0.0
    %1632 = vmatprep.subr.mxu0 0.0
    %1633 = vmatpush1.xpose.msra.mxu0 0.0
    %1634 = vmatprep.subr.mxu0 0.0
    %1635 = vmatpush1.xpose.msra.mxu0 0.0
    %1636 = vmatprep.subr.mxu0 0.0
    %1637 = vmatpush1.xpose.msra.mxu0 0.0
    %1638 = vmatprep.subr.mxu0 0.0
    %1639 = vmatpush1.xpose.msra.mxu0 0.0
    %1640 = vmatprep.subr.mxu0 0.0
    %1641 = vmatpush1.xpose.msra.mxu0 0.0
    %1642 = vmatprep.subr.mxu0 0.0
    %1643 = vmatpush1.xpose.msra.mxu0 0.0
    %1644 = vmatprep.subr.mxu0 0.0
    %1645 = vmatpush1.xpose.msra.mxu0 0.0
    %1646 = vmatprep.subr.mxu0 0.0
    %1647 = vmatpush1.xpose.msra.mxu0 0.0
    %1648 = vmatprep.subr.mxu0 0.0
    %1649 = vmatpush1.xpose.msra.mxu0 0.0
    %1650 = vmatprep.subr.mxu0 0.0
    %1651 = vmatpush1.xpose.msra.mxu0 0.0
    %1652 = vmatprep.subr.mxu0 0.0
    %1653 = vmatpush1.xpose.msra.mxu0 0.0
    %1654 = vmatprep.subr.mxu0 0.0
    %1655 = vmatpush1.xpose.msra.mxu0 0.0
    %1656 = vmatprep.subr.mxu0 0.0
    %1657 = vmatpush1.xpose.msra.mxu0 0.0
    %1658 = vmatprep.subr.mxu0 0.0
    %1659 = vmatpush1.xpose.msra.mxu0 0.0
    %1660 = vmatprep.mubr.f32.mxu0 0.0
    %1661 = vmatmul.mubr.f32.gmra.mrb[0].mxu0 %v1592
    %v1662 = vpop.f32.mrb[0].mxu0
    %v1663 = vadd.f32 0.0, %v1662
    %v1664 = vpop.f32.mrb[0].mxu0
    %1665 = vdwg.mxu0
    %v1666 = vsel %vm280, %v1663, -inf
    %1667 = vmax.xlane.f32.xlu0 %v1666
    %v1668 = vpop.xlane.xlu0 %1667
    %v1669 = vsub.f32 %v1663, %v1668
    %v1670 = vmul.f32 %v1669, 1.442695
    %v1671 = vpow.pop %v1670
    %v1672 = vsel %vm280, %v1671, 0.0
    %1673 = vadd.xlane.f32.xlu0 %v1672
    %v1674 = vpop.xlane.xlu0 %1673
    %v1675 = vrcp.pop %v1674
    %v1676 = vmul.f32 %v1671, %v1675
    %1678 = vrot.lane.b32.xlu0 %v1423, 120
    %v1679 = vpop.permute.xlu0 %1678
    %v1682 = vsel %vm280, %v1676, 0
    %1684 = vmatprep.subr.mxu0 0.0
    %1685 = vmatpush1.msra.mxu0 %v1679
    %1686 = vmatprep.subr.mxu0 0.0
    %1687 = vmatpush1.msra.mxu0 0.0
    %1688 = vmatprep.subr.mxu0 0.0
    %1689 = vmatpush1.msra.mxu0 0.0
    %1690 = vmatprep.subr.mxu0 0.0
    %1691 = vmatpush1.msra.mxu0 0.0
    %1692 = vmatprep.subr.mxu0 0.0
    %1693 = vmatpush1.msra.mxu0 0.0
    %1694 = vmatprep.subr.mxu0 0.0
    %1695 = vmatpush1.msra.mxu0 0.0
    %1696 = vmatprep.subr.mxu0 0.0
    %1697 = vmatpush1.msra.mxu0 0.0
    %1698 = vmatprep.subr.mxu0 0.0
    %1699 = vmatpush1.msra.mxu0 0.0
    %1700 = vmatprep.subr.mxu0 0.0
    %1701 = vmatpush1.msra.mxu0 0.0
    %1702 = vmatprep.subr.mxu0 0.0
    %1703 = vmatpush1.msra.mxu0 0.0
    %1704 = vmatprep.subr.mxu0 0.0
    %1705 = vmatpush1.msra.mxu0 0.0
    %1706 = vmatprep.subr.mxu0 0.0
    %1707 = vmatpush1.msra.mxu0 0.0
    %1708 = vmatprep.subr.mxu0 0.0
    %1709 = vmatpush1.msra.mxu0 0.0
    %1710 = vmatprep.subr.mxu0 0.0
    %1711 = vmatpush1.msra.mxu0 0.0
    %1712 = vmatprep.subr.mxu0 0.0
    %1713 = vmatpush1.msra.mxu0 0.0
    %1714 = vmatprep.subr.mxu0 0.0
    %1715 = vmatpush1.msra.mxu0 0.0
    %1716 = vmatprep.subr.mxu0 0.0
    %1717 = vmatpush1.msra.mxu0 0.0
    %1718 = vmatprep.subr.mxu0 0.0
    %1719 = vmatpush1.msra.mxu0 0.0
    %1720 = vmatprep.subr.mxu0 0.0
    %1721 = vmatpush1.msra.mxu0 0.0
    %1722 = vmatprep.subr.mxu0 0.0
    %1723 = vmatpush1.msra.mxu0 0.0
    %1724 = vmatprep.subr.mxu0 0.0
    %1725 = vmatpush1.msra.mxu0 0.0
    %1726 = vmatprep.subr.mxu0 0.0
    %1727 = vmatpush1.msra.mxu0 0.0
    %1728 = vmatprep.subr.mxu0 0.0
    %1729 = vmatpush1.msra.mxu0 0.0
    %1730 = vmatprep.subr.mxu0 0.0
    %1731 = vmatpush1.msra.mxu0 0.0
    %1732 = vmatprep.subr.mxu0 0.0
    %1733 = vmatpush1.msra.mxu0 0.0
    %1734 = vmatprep.subr.mxu0 0.0
    %1735 = vmatpush1.msra.mxu0 0.0
    %1736 = vmatprep.subr.mxu0 0.0
    %1737 = vmatpush1.msra.mxu0 0.0
    %1738 = vmatprep.subr.mxu0 0.0
    %1739 = vmatpush1.msra.mxu0 0.0
    %1740 = vmatprep.subr.mxu0 0.0
    %1741 = vmatpush1.msra.mxu0 0.0
    %1742 = vmatprep.subr.mxu0 0.0
    %1743 = vmatpush1.msra.mxu0 0.0
    %1744 = vmatprep.subr.mxu0 0.0
    %1745 = vmatpush1.msra.mxu0 0.0
    %1746 = vmatprep.subr.mxu0 0.0
    %1747 = vmatpush1.msra.mxu0 0.0
    %1748 = vmatprep.mubr.f32.mxu0 0.0
    %1749 = vmatmul.mubr.f32.gmra.mrb[0].mxu0 %v1682
    %v1750 = vpop.f32.mrb[0].mxu0
    %v1751 = vadd.f32 0.0, %v1750
    %v1752 = vpop.f32.mrb[0].mxu0
    %1753 = vdwg.mxu0
    %1754 = vrot.lane.b32.xlu0 %v1330, 112
    %v1755 = vpop.permute.xlu0 %1754
    %1756 = vrot.lane.b32.xlu0 %v1331, 80
    %v1757 = vpop.permute.xlu0 %1756
    %v1758 = vsel %vm280, %v1755, 0
    %v1760 = vsel %vm280, %v1757, 0
    %1762 = vmatprep.subr.mxu0 0.0
    %1763 = vmatpush1.xpose.msra.mxu0 %v1760
    %1764 = vmatprep.subr.mxu0 0.0
    %1765 = vmatpush1.xpose.msra.mxu0 0.0
    %1766 = vmatprep.subr.mxu0 0.0
    %1767 = vmatpush1.xpose.msra.mxu0 0.0
    %1768 = vmatprep.subr.mxu0 0.0
    %1769 = vmatpush1.xpose.msra.mxu0 0.0
    %1770 = vmatprep.subr.mxu0 0.0
    %1771 = vmatpush1.xpose.msra.mxu0 0.0
    %1772 = vmatprep.subr.mxu0 0.0
    %1773 = vmatpush1.xpose.msra.mxu0 0.0
    %1774 = vmatprep.subr.mxu0 0.0
    %1775 = vmatpush1.xpose.msra.mxu0 0.0
    %1776 = vmatprep.subr.mxu0 0.0
    %1777 = vmatpush1.xpose.msra.mxu0 0.0
    %1778 = vmatprep.subr.mxu0 0.0
    %1779 = vmatpush1.xpose.msra.mxu0 0.0
    %1780 = vmatprep.subr.mxu0 0.0
    %1781 = vmatpush1.xpose.msra.mxu0 0.0
    %1782 = vmatprep.subr.mxu0 0.0
    %1783 = vmatpush1.xpose.msra.mxu0 0.0
    %1784 = vmatprep.subr.mxu0 0.0
    %1785 = vmatpush1.xpose.msra.mxu0 0.0
    %1786 = vmatprep.subr.mxu0 0.0
    %1787 = vmatpush1.xpose.msra.mxu0 0.0
    %1788 = vmatprep.subr.mxu0 0.0
    %1789 = vmatpush1.xpose.msra.mxu0 0.0
    %1790 = vmatprep.subr.mxu0 0.0
    %1791 = vmatpush1.xpose.msra.mxu0 0.0
    %1792 = vmatprep.subr.mxu0 0.0
    %1793 = vmatpush1.xpose.msra.mxu0 0.0
    %1794 = vmatprep.subr.mxu0 0.0
    %1795 = vmatpush1.xpose.msra.mxu0 0.0
    %1796 = vmatprep.subr.mxu0 0.0
    %1797 = vmatpush1.xpose.msra.mxu0 0.0
    %1798 = vmatprep.subr.mxu0 0.0
    %1799 = vmatpush1.xpose.msra.mxu0 0.0
    %1800 = vmatprep.subr.mxu0 0.0
    %1801 = vmatpush1.xpose.msra.mxu0 0.0
    %1802 = vmatprep.subr.mxu0 0.0
    %1803 = vmatpush1.xpose.msra.mxu0 0.0
    %1804 = vmatprep.subr.mxu0 0.0
    %1805 = vmatpush1.xpose.msra.mxu0 0.0
    %1806 = vmatprep.subr.mxu0 0.0
    %1807 = vmatpush1.xpose.msra.mxu0 0.0
    %1808 = vmatprep.subr.mxu0 0.0
    %1809 = vmatpush1.xpose.msra.mxu0 0.0
    %1810 = vmatprep.subr.mxu0 0.0
    %1811 = vmatpush1.xpose.msra.mxu0 0.0
    %1812 = vmatprep.subr.mxu0 0.0
    %1813 = vmatpush1.xpose.msra.mxu0 0.0
    %1814 = vmatprep.subr.mxu0 0.0
    %1815 = vmatpush1.xpose.msra.mxu0 0.0
    %1816 = vmatprep.subr.mxu0 0.0
    %1817 = vmatpush1.xpose.msra.mxu0 0.0
    %1818 = vmatprep.subr.mxu0 0.0
    %1819 = vmatpush1.xpose.msra.mxu0 0.0
    %1820 = vmatprep.subr.mxu0 0.0
    %1821 = vmatpush1.xpose.msra.mxu0 0.0
    %1822 = vmatprep.subr.mxu0 0.0
    %1823 = vmatpush1.xpose.msra.mxu0 0.0
    %1824 = vmatprep.subr.mxu0 0.0
    %1825 = vmatpush1.xpose.msra.mxu0 0.0
    %1826 = vmatprep.mubr.f32.mxu0 0.0
    %1827 = vmatmul.mubr.f32.gmra.mrb[0].mxu0 %v1758
    %v1828 = vpop.f32.mrb[0].mxu0
    %v1829 = vadd.f32 0.0, %v1828
    %v1830 = vpop.f32.mrb[0].mxu0
    %1831 = vdwg.mxu0
    %v1832 = vsel %vm280, %v1829, -inf
    %1833 = vmax.xlane.f32.xlu0 %v1832
    %v1834 = vpop.xlane.xlu0 %1833
    %v1835 = vsub.f32 %v1829, %v1834
    %v1836 = vmul.f32 %v1835, 1.442695
    %v1837 = vpow.pop %v1836
    %v1838 = vsel %vm280, %v1837, 0.0
    %1839 = vadd.xlane.f32.xlu0 %v1838
    %v1840 = vpop.xlane.xlu0 %1839
    %v1841 = vrcp.pop %v1840
    %v1842 = vmul.f32 %v1837, %v1841
    %1843 = vrot.lane.b32.xlu0 %v1423, 112
    %v1844 = vpop.permute.xlu0 %1843
    %v1847 = vsel %vm280, %v1842, 0
    %1849 = vmatprep.subr.mxu0 0.0
    %1850 = vmatpush1.msra.mxu0 %v1844
    %1851 = vmatprep.subr.mxu0 0.0
    %1852 = vmatpush1.msra.mxu0 0.0
    %1853 = vmatprep.subr.mxu0 0.0
    %1854 = vmatpush1.msra.mxu0 0.0
    %1855 = vmatprep.subr.mxu0 0.0
    %1856 = vmatpush1.msra.mxu0 0.0
    %1857 = vmatprep.subr.mxu0 0.0
    %1858 = vmatpush1.msra.mxu0 0.0
    %1859 = vmatprep.subr.mxu0 0.0
    %1860 = vmatpush1.msra.mxu0 0.0
    %1861 = vmatprep.subr.mxu0 0.0
    %1862 = vmatpush1.msra.mxu0 0.0
    %1863 = vmatprep.subr.mxu0 0.0
    %1864 = vmatpush1.msra.mxu0 0.0
    %1865 = vmatprep.subr.mxu0 0.0
    %1866 = vmatpush1.msra.mxu0 0.0
    %1867 = vmatprep.subr.mxu0 0.0
    %1868 = vmatpush1.msra.mxu0 0.0
    %1869 = vmatprep.subr.mxu0 0.0
    %1870 = vmatpush1.msra.mxu0 0.0
    %1871 = vmatprep.subr.mxu0 0.0
    %1872 = vmatpush1.msra.mxu0 0.0
    %1873 = vmatprep.subr.mxu0 0.0
    %1874 = vmatpush1.msra.mxu0 0.0
    %1875 = vmatprep.subr.mxu0 0.0
    %1876 = vmatpush1.msra.mxu0 0.0
    %1877 = vmatprep.subr.mxu0 0.0
    %1878 = vmatpush1.msra.mxu0 0.0
    %1879 = vmatprep.subr.mxu0 0.0
    %1880 = vmatpush1.msra.mxu0 0.0
    %1881 = vmatprep.subr.mxu0 0.0
    %1882 = vmatpush1.msra.mxu0 0.0
    %1883 = vmatprep.subr.mxu0 0.0
    %1884 = vmatpush1.msra.mxu0 0.0
    %1885 = vmatprep.subr.mxu0 0.0
    %1886 = vmatpush1.msra.mxu0 0.0
    %1887 = vmatprep.subr.mxu0 0.0
    %1888 = vmatpush1.msra.mxu0 0.0
    %1889 = vmatprep.subr.mxu0 0.0
    %1890 = vmatpush1.msra.mxu0 0.0
    %1891 = vmatprep.subr.mxu0 0.0
    %1892 = vmatpush1.msra.mxu0 0.0
    %1893 = vmatprep.subr.mxu0 0.0
    %1894 = vmatpush1.msra.mxu0 0.0
    %1895 = vmatprep.subr.mxu0 0.0
    %1896 = vmatpush1.msra.mxu0 0.0
    %1897 = vmatprep.subr.mxu0 0.0
    %1898 = vmatpush1.msra.mxu0 0.0
    %1899 = vmatprep.subr.mxu0 0.0
    %1900 = vmatpush1.msra.mxu0 0.0
    %1901 = vmatprep.subr.mxu0 0.0
    %1902 = vmatpush1.msra.mxu0 0.0
    %1903 = vmatprep.subr.mxu0 0.0
    %1904 = vmatpush1.msra.mxu0 0.0
    %1905 = vmatprep.subr.mxu0 0.0
    %1906 = vmatpush1.msra.mxu0 0.0
    %1907 = vmatprep.subr.mxu0 0.0
    %1908 = vmatpush1.msra.mxu0 0.0
    %1909 = vmatprep.subr.mxu0 0.0
    %1910 = vmatpush1.msra.mxu0 0.0
    %1911 = vmatprep.subr.mxu0 0.0
    %1912 = vmatpush1.msra.mxu0 0.0
    %1913 = vmatprep.mubr.f32.mxu0 0.0
    %1914 = vmatmul.mubr.f32.gmra.mrb[0].mxu0 %v1847
    %v1915 = vpop.f32.mrb[0].mxu0
    %v1916 = vadd.f32 0.0, %v1915
    %v1917 = vpop.f32.mrb[0].mxu0
    %1918 = vdwg.mxu0
    %1919 = vrot.lane.b32.xlu0 %v1330, 104
    %v1920 = vpop.permute.xlu0 %1919
    %1921 = vrot.lane.b32.xlu0 %v1331, 72
    %v1922 = vpop.permute.xlu0 %1921
    %v1923 = vsel %vm280, %v1920, 0
    %v1925 = vsel %vm280, %v1922, 0
    %1927 = vmatprep.subr.mxu0 0.0
    %1928 = vmatpush1.xpose.msra.mxu0 %v1925
    %1929 = vmatprep.subr.mxu0 0.0
    %1930 = vmatpush1.xpose.msra.mxu0 0.0
    %1931 = vmatprep.subr.mxu0 0.0
    %1932 = vmatpush1.xpose.msra.mxu0 0.0
    %1933 = vmatprep.subr.mxu0 0.0
    %1934 = vmatpush1.xpose.msra.mxu0 0.0
    %1935 = vmatprep.subr.mxu0 0.0
    %1936 = vmatpush1.xpose.msra.mxu0 0.0
    %1937 = vmatprep.subr.mxu0 0.0
    %1938 = vmatpush1.xpose.msra.mxu0 0.0
    %1939 = vmatprep.subr.mxu0 0.0
    %1940 = vmatpush1.xpose.msra.mxu0 0.0
    %1941 = vmatprep.subr.mxu0 0.0
    %1942 = vmatpush1.xpose.msra.mxu0 0.0
    %1943 = vmatprep.subr.mxu0 0.0
    %1944 = vmatpush1.xpose.msra.mxu0 0.0
    %1945 = vmatprep.subr.mxu0 0.0
    %1946 = vmatpush1.xpose.msra.mxu0 0.0
    %1947 = vmatprep.subr.mxu0 0.0
    %1948 = vmatpush1.xpose.msra.mxu0 0.0
    %1949 = vmatprep.subr.mxu0 0.0
    %1950 = vmatpush1.xpose.msra.mxu0 0.0
    %1951 = vmatprep.subr.mxu0 0.0
    %1952 = vmatpush1.xpose.msra.mxu0 0.0
    %1953 = vmatprep.subr.mxu0 0.0
    %1954 = vmatpush1.xpose.msra.mxu0 0.0
    %1955 = vmatprep.subr.mxu0 0.0
    %1956 = vmatpush1.xpose.msra.mxu0 0.0
    %1957 = vmatprep.subr.mxu0 0.0
    %1958 = vmatpush1.xpose.msra.mxu0 0.0
    %1959 = vmatprep.subr.mxu0 0.0
    %1960 = vmatpush1.xpose.msra.mxu0 0.0
    %1961 = vmatprep.subr.mxu0 0.0
    %1962 = vmatpush1.xpose.msra.mxu0 0.0
    %1963 = vmatprep.subr.mxu0 0.0
    %1964 = vmatpush1.xpose.msra.mxu0 0.0
    %1965 = vmatprep.subr.mxu0 0.0
    %1966 = vmatpush1.xpose.msra.mxu0 0.0
    %1967 = vmatprep.subr.mxu0 0.0
    %1968 = vmatpush1.xpose.msra.mxu0 0.0
    %1969 = vmatprep.subr.mxu0 0.0
    %1970 = vmatpush1.xpose.msra.mxu0 0.0
    %1971 = vmatprep.subr.mxu0 0.0
    %1972 = vmatpush1.xpose.msra.mxu0 0.0
    %1973 = vmatprep.subr.mxu0 0.0
    %1974 = vmatpush1.xpose.msra.mxu0 0.0
    %1975 = vmatprep.subr.mxu0 0.0
    %1976 = vmatpush1.xpose.msra.mxu0 0.0
    %1977 = vmatprep.subr.mxu0 0.0
    %1978 = vmatpush1.xpose.msra.mxu0 0.0
    %1979 = vmatprep.subr.mxu0 0.0
    %1980 = vmatpush1.xpose.msra.mxu0 0.0
    %1981 = vmatprep.subr.mxu0 0.0
    %1982 = vmatpush1.xpose.msra.mxu0 0.0
    %1983 = vmatprep.subr.mxu0 0.0
    %1984 = vmatpush1.xpose.msra.mxu0 0.0
    %1985 = vmatprep.subr.mxu0 0.0
    %1986 = vmatpush1.xpose.msra.mxu0 0.0
    %1987 = vmatprep.subr.mxu0 0.0
    %1988 = vmatpush1.xpose.msra.mxu0 0.0
    %1989 = vmatprep.subr.mxu0 0.0
    %1990 = vmatpush1.xpose.msra.mxu0 0.0
    %1991 = vmatprep.mubr.f32.mxu0 0.0
    %1992 = vmatmul.mubr.f32.gmra.mrb[0].mxu0 %v1923
    %v1993 = vpop.f32.mrb[0].mxu0
    %v1994 = vadd.f32 0.0, %v1993
    %v1995 = vpop.f32.mrb[0].mxu0
    %1996 = vdwg.mxu0
    %v1997 = vsel %vm280, %v1994, -inf
    %1998 = vmax.xlane.f32.xlu0 %v1997
    %v1999 = vpop.xlane.xlu0 %1998
    %v2000 = vsub.f32 %v1994, %v1999
    %v2001 = vmul.f32 %v2000, 1.442695
    %v2002 = vpow.pop %v2001
    %v2003 = vsel %vm280, %v2002, 0.0
    %2004 = vadd.xlane.f32.xlu0 %v2003
    %v2005 = vpop.xlane.xlu0 %2004
    %v2006 = vrcp.pop %v2005
    %v2007 = vmul.f32 %v2002, %v2006
    %2008 = vrot.lane.b32.xlu0 %v1423, 104
    %v2009 = vpop.permute.xlu0 %2008
    %v2012 = vsel %vm280, %v2007, 0
    %2014 = vmatprep.subr.mxu0 0.0
    %2015 = vmatpush1.msra.mxu0 %v2009
    %2016 = vmatprep.subr.mxu0 0.0
    %2017 = vmatpush1.msra.mxu0 0.0
    %2018 = vmatprep.subr.mxu0 0.0
    %2019 = vmatpush1.msra.mxu0 0.0
    %2020 = vmatprep.subr.mxu0 0.0
    %2021 = vmatpush1.msra.mxu0 0.0
    %2022 = vmatprep.subr.mxu0 0.0
    %2023 = vmatpush1.msra.mxu0 0.0
    %2024 = vmatprep.subr.mxu0 0.0
    %2025 = vmatpush1.msra.mxu0 0.0
    %2026 = vmatprep.subr.mxu0 0.0
    %2027 = vmatpush1.msra.mxu0 0.0
    %2028 = vmatprep.subr.mxu0 0.0
    %2029 = vmatpush1.msra.mxu0 0.0
    %2030 = vmatprep.subr.mxu0 0.0
    %2031 = vmatpush1.msra.mxu0 0.0
    %2032 = vmatprep.subr.mxu0 0.0
    %2033 = vmatpush1.msra.mxu0 0.0
    %2034 = vmatprep.subr.mxu0 0.0
    %2035 = vmatpush1.msra.mxu0 0.0
    %2036 = vmatprep.subr.mxu0 0.0
    %2037 = vmatpush1.msra.mxu0 0.0
    %2038 = vmatprep.subr.mxu0 0.0
    %2039 = vmatpush1.msra.mxu0 0.0
    %2040 = vmatprep.subr.mxu0 0.0
    %2041 = vmatpush1.msra.mxu0 0.0
    %2042 = vmatprep.subr.mxu0 0.0
    %2043 = vmatpush1.msra.mxu0 0.0
    %2044 = vmatprep.subr.mxu0 0.0
    %2045 = vmatpush1.msra.mxu0 0.0
    %2046 = vmatprep.subr.mxu0 0.0
    %2047 = vmatpush1.msra.mxu0 0.0
    %2048 = vmatprep.subr.mxu0 0.0
    %2049 = vmatpush1.msra.mxu0 0.0
    %2050 = vmatprep.subr.mxu0 0.0
    %2051 = vmatpush1.msra.mxu0 0.0
    %2052 = vmatprep.subr.mxu0 0.0
    %2053 = vmatpush1.msra.mxu0 0.0
    %2054 = vmatprep.subr.mxu0 0.0
    %2055 = vmatpush1.msra.mxu0 0.0
    %2056 = vmatprep.subr.mxu0 0.0
    %2057 = vmatpush1.msra.mxu0 0.0
    %2058 = vmatprep.subr.mxu0 0.0
    %2059 = vmatpush1.msra.mxu0 0.0
    %2060 = vmatprep.subr.mxu0 0.0
    %2061 = vmatpush1.msra.mxu0 0.0
    %2062 = vmatprep.subr.mxu0 0.0
    %2063 = vmatpush1.msra.mxu0 0.0
    %2064 = vmatprep.subr.mxu0 0.0
    %2065 = vmatpush1.msra.mxu0 0.0
    %2066 = vmatprep.subr.mxu0 0.0
    %2067 = vmatpush1.msra.mxu0 0.0
    %2068 = vmatprep.subr.mxu0 0.0
    %2069 = vmatpush1.msra.mxu0 0.0
    %2070 = vmatprep.subr.mxu0 0.0
    %2071 = vmatpush1.msra.mxu0 0.0
    %2072 = vmatprep.subr.mxu0 0.0
    %2073 = vmatpush1.msra.mxu0 0.0
    %2074 = vmatprep.subr.mxu0 0.0
    %2075 = vmatpush1.msra.mxu0 0.0
    %2076 = vmatprep.subr.mxu0 0.0
    %2077 = vmatpush1.msra.mxu0 0.0
    %2078 = vmatprep.mubr.f32.mxu0 0.0
    %2079 = vmatmul.mubr.f32.gmra.mrb[0].mxu0 %v2012
    %v2080 = vpop.f32.mrb[0].mxu0
    %v2081 = vadd.f32 0.0, %v2080
    %v2082 = vpop.f32.mrb[0].mxu0
    %2083 = vdwg.mxu0
    %2085 = vrot.lane.b32.xlu0 %v1751, 8
    %v2086 = vpop.permute.xlu0 %2085
    %2089 = vrot.lane.b32.xlu0 %v1916, 16
    %v2090 = vpop.permute.xlu0 %2089
    %2093 = vrot.lane.b32.xlu0 %v2081, 24
    %v2094 = vpop.permute.xlu0 %2093
    %v2096 = vsel %vm280, %v1585, %v2086
    %v2097 = vsel %vm949, %v2096, %v2090
    %v2098 = vsel %vm951, %v2097, %v2094
    %v2100 = vsel %vm76, %v2098, 0
    %2102 = vmatprep.subr.mxu0 0.0
    %2103 = vmatpush1.msra.mxu0 %v958
    %2104 = vmatprep.subr.mxu0 0.0
    %2105 = vmatpush1.msra.mxu0 %v960
    %2106 = vmatprep.subr.mxu0 0.0
    %2107 = vmatpush1.msra.mxu0 %v962
    %2108 = vmatprep.subr.mxu0 0.0
    %2109 = vmatpush1.msra.mxu0 %v964
    %2110 = vmatprep.subr.mxu0 0.0
    %2111 = vmatpush1.msra.mxu0 0.0
    %2112 = vmatprep.subr.mxu0 0.0
    %2113 = vmatpush1.msra.mxu0 0.0
    %2114 = vmatprep.subr.mxu0 0.0
    %2115 = vmatpush1.msra.mxu0 0.0
    %2116 = vmatprep.subr.mxu0 0.0
    %2117 = vmatpush1.msra.mxu0 0.0
    %2118 = vmatprep.subr.mxu0 0.0
    %2119 = vmatpush1.msra.mxu0 0.0
    %2120 = vmatprep.subr.mxu0 0.0
    %2121 = vmatpush1.msra.mxu0 0.0
    %2122 = vmatprep.subr.mxu0 0.0
    %2123 = vmatpush1.msra.mxu0 0.0
    %2124 = vmatprep.subr.mxu0 0.0
    %2125 = vmatpush1.msra.mxu0 0.0
    %2126 = vmatprep.subr.mxu0 0.0
    %2127 = vmatpush1.msra.mxu0 0.0
    %2128 = vmatprep.subr.mxu0 0.0
    %2129 = vmatpush1.msra.mxu0 0.0
    %2130 = vmatprep.subr.mxu0 0.0
    %2131 = vmatpush1.msra.mxu0 0.0
    %2132 = vmatprep.subr.mxu0 0.0
    %2133 = vmatpush1.msra.mxu0 0.0
    %2134 = vmatprep.subr.mxu0 0.0
    %2135 = vmatpush1.msra.mxu0 0.0
    %2136 = vmatprep.subr.mxu0 0.0
    %2137 = vmatpush1.msra.mxu0 0.0
    %2138 = vmatprep.subr.mxu0 0.0
    %2139 = vmatpush1.msra.mxu0 0.0
    %2140 = vmatprep.subr.mxu0 0.0
    %2141 = vmatpush1.msra.mxu0 0.0
    %2142 = vmatprep.subr.mxu0 0.0
    %2143 = vmatpush1.msra.mxu0 0.0
    %2144 = vmatprep.subr.mxu0 0.0
    %2145 = vmatpush1.msra.mxu0 0.0
    %2146 = vmatprep.subr.mxu0 0.0
    %2147 = vmatpush1.msra.mxu0 0.0
    %2148 = vmatprep.subr.mxu0 0.0
    %2149 = vmatpush1.msra.mxu0 0.0
    %2150 = vmatprep.subr.mxu0 0.0
    %2151 = vmatpush1.msra.mxu0 0.0
    %2152 = vmatprep.subr.mxu0 0.0
    %2153 = vmatpush1.msra.mxu0 0.0
    %2154 = vmatprep.subr.mxu0 0.0
    %2155 = vmatpush1.msra.mxu0 0.0
    %2156 = vmatprep.subr.mxu0 0.0
    %2157 = vmatpush1.msra.mxu0 0.0
    %2158 = vmatprep.subr.mxu0 0.0
    %2159 = vmatpush1.msra.mxu0 0.0
    %2160 = vmatprep.subr.mxu0 0.0
    %2161 = vmatpush1.msra.mxu0 0.0
    %2162 = vmatprep.subr.mxu0 0.0
    %2163 = vmatpush1.msra.mxu0 0.0
    %2164 = vmatprep.subr.mxu0 0.0
    %2165 = vmatpush1.msra.mxu0 0.0
    %2166 = vmatprep.mubr.f32.mxu0 0.0
    %2167 = vmatmul.mubr.f32.gmra.mrb[0].mxu0 %v2100
    %v2168 = vpop.f32.mrb[0].mxu0
    %v2169 = vadd.f32 %v956, %v2168
    %v2170 = vpop.f32.mrb[0].mxu0
    %2171 = vdwg.mxu0
    %v2173 = vrot.slane %v2169, 1
    %v2174 = vrot.slane %v2169, 2
    %v2175 = vrot.slane %v2169, 3
    %v2176 = vrot.slane %v2169, 4
    %v2177 = vrot.slane %v2169, 5
    %v2178 = vrot.slane %v2169, 6
    %v2179 = vrot.slane %v2169, 7
    %v2188 = vadd.f32 %v1212, %v2169
    %v2189 = vadd.f32 %v1213, %v2173
    %v2190 = vadd.f32 %v1214, %v2174
    %v2191 = vadd.f32 %v1215, %v2175
    %v2192 = vadd.f32 %v1216, %v2176
    %v2193 = vadd.f32 %v1217, %v2177
    %v2194 = vadd.f32 %v1218, %v2178
    %v2195 = vadd.f32 %v1219, %v2179
    %v2204 = vrot.slane %v2189, 7
    %v2205 = vsel %vm56, %v2204, %v2188
    %v2206 = vrot.slane %v2190, 6
    %v2207 = vsel %vm59, %v2206, %v2205
    %v2208 = vrot.slane %v2191, 5
    %v2209 = vsel %vm62, %v2208, %v2207
    %v2210 = vrot.slane %v2192, 4
    %v2211 = vsel %vm65, %v2210, %v2209
    %v2212 = vrot.slane %v2193, 3
    %v2213 = vsel %vm68, %v2212, %v2211
    %v2214 = vrot.slane %v2194, 2
    %v2215 = vsel %vm71, %v2214, %v2213
    %v2216 = vrot.slane %v2195, 1
    %v2217 = vsel %vm74, %v2216, %v2215
    %v2219 = vsel %vm76, %v2217, 0.0
    %2220 = vadd.xlane.f32.xlu0 %v2219
    %v2221 = vpop.xlane.xlu0 %2220
    %v2222 = vmul.f32 %v2221, %v1092
    %v2224 = vrot.slane %v2222, 1
    %v2225 = vrot.slane %v2222, 2
    %v2226 = vrot.slane %v2222, 3
    %v2227 = vrot.slane %v2222, 4
    %v2228 = vrot.slane %v2222, 5
    %v2229 = vrot.slane %v2222, 6
    %v2230 = vrot.slane %v2222, 7
    %v2239 = vsub.f32 %v2188, %v2222
    %v2240 = vsub.f32 %v2189, %v2224
    %v2241 = vsub.f32 %v2190, %v2225
    %v2242 = vsub.f32 %v2191, %v2226
    %v2243 = vsub.f32 %v2192, %v2227
    %v2244 = vsub.f32 %v2193, %v2228
    %v2245 = vsub.f32 %v2194, %v2229
    %v2246 = vsub.f32 %v2195, %v2230
    %v2247 = vmul.f32 %v2239, %v2239
    %v2248 = vmul.f32 %v2240, %v2240
    %v2249 = vmul.f32 %v2241, %v2241
    %v2250 = vmul.f32 %v2242, %v2242
    %v2251 = vmul.f32 %v2243, %v2243
    %v2252 = vmul.f32 %v2244, %v2244
    %v2253 = vmul.f32 %v2245, %v2245
    %v2254 = vmul.f32 %v2246, %v2246
    %v2263 = vrot.slane %v2248, 7
    %v2264 = vsel %vm56, %v2263, %v2247
    %v2265 = vrot.slane %v2249, 6
    %v2266 = vsel %vm59, %v2265, %v2264
    %v2267 = vrot.slane %v2250, 5
    %v2268 = vsel %vm62, %v2267, %v2266
    %v2269 = vrot.slane %v2251, 4
    %v2270 = vsel %vm65, %v2269, %v2268
    %v2271 = vrot.slane %v2252, 3
    %v2272 = vsel %vm68, %v2271, %v2270
    %v2273 = vrot.slane %v2253, 2
    %v2274 = vsel %vm71, %v2273, %v2272
    %v2275 = vrot.slane %v2254, 1
    %v2276 = vsel %vm74, %v2275, %v2274
    %v2278 = vsel %vm76, %v2276, 0.0
    %2279 = vadd.xlane.f32.xlu0 %v2278
    %v2280 = vpop.xlane.xlu0 %2279
    %v2281 = vmul.f32 %v2280, %v1092
    %v2282 = vadd.f32 %v2281, 1e-05
    %v2283 = vrsqrt.pop %v2282
    %v2285 = vrot.slane %v2283, 1
    %v2286 = vrot.slane %v2283, 2
    %v2287 = vrot.slane %v2283, 3
    %v2288 = vrot.slane %v2283, 4
    %v2289 = vrot.slane %v2283, 5
    %v2290 = vrot.slane %v2283, 6
    %v2291 = vrot.slane %v2283, 7
    %v2300 = vmul.f32 %v2239, %v2283
    %v2301 = vmul.f32 %v2240, %v2285
    %v2302 = vmul.f32 %v2241, %v2286
    %v2303 = vmul.f32 %v2242, %v2287
    %v2304 = vmul.f32 %v2243, %v2288
    %v2305 = vmul.f32 %v2244, %v2289
    %v2306 = vmul.f32 %v2245, %v2290
    %v2307 = vmul.f32 %v2246, %v2291
    %v2308 = vmul.f32 %v2300, %v1182
    %v2309 = vmul.f32 %v2301, %v1182
    %v2310 = vmul.f32 %v2302, %v1182
    %v2311 = vmul.f32 %v2303, %v1182
    %v2312 = vmul.f32 %v2304, %v1182
    %v2313 = vmul.f32 %v2305, %v1182
    %v2314 = vmul.f32 %v2306, %v1182
    %v2315 = vmul.f32 %v2307, %v1182
    %v2316 = vadd.f32 %v2308, %v1194
    %v2317 = vadd.f32 %v2309, %v1194
    %v2318 = vadd.f32 %v2310, %v1194
    %v2319 = vadd.f32 %v2311, %v1194
    %v2320 = vadd.f32 %v2312, %v1194
    %v2321 = vadd.f32 %v2313, %v1194
    %v2322 = vadd.f32 %v2314, %v1194
    %v2323 = vadd.f32 %v2315, %v1194
    %2324 = vst.msk [vmem:[#allocation2 + $0x1] sm:$0x1] %vm1203, %v2316
    %2325 = vst.msk [vmem:[#allocation2 + $0x3] sm:$0x1] %vm1203, %v2317
    %2326 = vst.msk [vmem:[#allocation2 + $0x5] sm:$0x1] %vm1203, %v2318
    %2327 = vst.msk [vmem:[#allocation2 + $0x7] sm:$0x1] %vm1203, %v2319
    %2328 = vst.msk [vmem:[#allocation2 + $0x9] sm:$0x1] %vm1203, %v2320
    %2329 = vst.msk [vmem:[#allocation2 + $0xb] sm:$0x1] %vm1203, %v2321
    %2330 = vst.msk [vmem:[#allocation2 + $0xd] sm:$0x1] %vm1203, %v2322
    %2331 = vst.msk [vmem:[#allocation2 + $0xf] sm:$0x1] %vm1203, %v2323
    // Predicated region
    $region18: #{self_attention_layer.1} parent=1 // pred_check
      _
    $region19: #{self_attention_layer.1} parent=1 // pred_check_branch
      %2333 = sbr.rel (0) target = $region21
    $region20: #{self_attention_layer.1} parent=1 // pred_region
      %s2335 = ssub.s32 256, 256
      %2336 = vsyncadd [#allocation3], %s2335
      %s2337 = sshll.u32 [#allocation2], 4
      %s2338 = int_to_ptr.vmem [resolvable:$true] %s2337
      %2343 = dma.vmem_to_hbm [thread:$0]  %s2338, 256, %s4, [#allocation3], 32, 32, 2
    $region21: #{self_attention_layer.1} parent=1 // pred_fallthru
      _
    // Predicated region
    $region22: #{self_attention_layer.1} parent=1 // pred_check
      _
    $region23: #{self_attention_layer.1} parent=1 // pred_check_branch
      %2345 = sbr.rel (0) target = $region25
    $region24: #{self_attention_layer.1} parent=1 // pred_region
      %2346 = dma.done [#allocation3], 256
    $region25: #{self_attention_layer.1} parent=1 // pred_fallthru
      _
    %2347 = vsyncpa [#allocation3], 1

</llo_original>
